<compile_context>
chip_gen: v7x
topology: tpu7x:2x2x1
jax: 0.10.0
libtpu: 0.0.40
codegen_flags: <defaults>
</compile_context>

<pallas_src>
import functools
import math

import jax
import jax.numpy as jnp
from jax.experimental import pallas as pl
from jax.experimental.pallas import tpu as pltpu


# ----------------------------------------------------------------------------
# Plain-JAX glue: sinusoidal time embedding + MLP (tiny, per-batch vectors)
# ----------------------------------------------------------------------------
def sinusoidal_pos_emb(t, dim, scale=1000.0):
    half = dim // 2
    emb = math.log(10000.0) / (half - 1)
    freqs = jnp.exp(jnp.arange(half, dtype=jnp.float32) * -emb)
    args = scale * t[:, None] * freqs[None, :]
    return jnp.concatenate([jnp.sin(args), jnp.cos(args)], axis=-1)


def mish(x):
    return x * jnp.tanh(jax.nn.softplus(x))


# ----------------------------------------------------------------------------
# Zero-padding helpers (lane-dense channel dims; padding never changes math)
# ----------------------------------------------------------------------------
def _round_up(v, m):
    return -(-v // m) * m


def _pad_last_to(a, new):
    if a.shape[-1] == new:
        return a
    cfg = [(0, 0)] * (a.ndim - 1) + [(0, new - a.shape[-1])]
    return jnp.pad(a, cfg)


def _pad_axis_to(a, axis, new):
    if a.shape[axis] == new:
        return a
    cfg = [(0, 0)] * a.ndim
    cfg[axis] = (0, new - a.shape[axis])
    return jnp.pad(a, cfg)


def _pad_halves_last(a, half_real, half_new):
    # last axis = [half_a(half_real) | half_b(half_real)]; zero-pad each half.
    if half_real == half_new:
        return a
    return jnp.concatenate([_pad_last_to(a[..., :half_real], half_new),
                            _pad_last_to(a[..., half_real:], half_new)],
                           axis=-1)


# ----------------------------------------------------------------------------
# Pallas kernel: one batch element per grid step; WN layers unrolled in-kernel
# ----------------------------------------------------------------------------
def _wn_decoder_kernel(xm_ref, mask_ref, g_ref,
                       pre_w_ref, pre_b_ref,
                       in_w_ref, rs_w_ref, rs_b_ref,
                       proj_w_ref, proj_b_ref,
                       out_ref,
                       h_pad_ref,
                       *, henc, henc_p, kernel_size, dilation_rate,
                       n_layers, halo_l):
    T = mask_ref.shape[1]
    dot = functools.partial(jnp.dot, preferred_element_type=jnp.float32)
    bf16 = jnp.bfloat16

    mask = mask_ref[0]                                        # (T, 1) f32

    # zero the halo-padded hidden-state scratch (halos must stay zero)
    h_pad_ref[...] = jnp.zeros_like(h_pad_ref)

    # fused pre-conv on the wrapper-stacked [x ; mu] block: one MXU matmul
    pre = dot(xm_ref[0].astype(bf16), pre_w_ref[...]) + pre_b_ref[...]   # (2T, hidden) f32
    hx = pre[:T] * mask                                       # pre(x) * mask
    hm = pre[T:]                                              # pre(mu), unmasked
    pieces = [hx, hm]
    if henc_p > henc:
        pieces.append(jnp.zeros((T, henc_p - henc), jnp.float32))
    h_pad_ref[pl.ds(halo_l, T), :] = jnp.concatenate(pieces, axis=-1)

    skip_acc = None
    for l in range(n_layers):                                 # unrolled: static dilations
        d = dilation_rate ** l
        pad = d * (kernel_size - 1) // 2

        h_cur = h_pad_ref[pl.ds(halo_l, T), :]                # aligned interior, f32

        # stacked tap operand: (T, k*henc_p) bf16 — one big-K matmul per layer
        taps = [h_pad_ref[pl.ds(halo_l - pad + j * d, T), :].astype(bf16)
                for j in range(kernel_size)]
        stacked = taps[0] if kernel_size == 1 else jnp.concatenate(taps, axis=-1)

        # g already folds the WN in-conv bias (done in the wrapper)
        x_in = dot(stacked, in_w_ref[l]) + g_ref[0, l]        # (T, 2*henc_p) f32
        acts = jnp.tanh(x_in[:, :henc_p]) * jax.nn.sigmoid(x_in[:, henc_p:])
        rs = dot(acts.astype(bf16), rs_w_ref[l]) + rs_b_ref[l]  # (T, 2*henc_p)

        if l < n_layers - 1:
            h_pad_ref[pl.ds(halo_l, T), :] = (h_cur + rs[:, :henc_p]) * mask
            contrib = rs[:, henc_p:]                          # skip half
        else:
            contrib = rs[:, :henc_p]                          # last layer: full output
        skip_acc = contrib if skip_acc is None else skip_acc + contrib

    out = skip_acc * mask
    stats = dot(out.astype(bf16), proj_w_ref[...]) + proj_b_ref[...]
    out_ref[0] = stats * mask                                 # lane-dense store


# ----------------------------------------------------------------------------
# Wrapper
# ----------------------------------------------------------------------------
def vits_wn_decoder_forward(params, x, x_mask, mu, t, *,
                            hidden, kernel_size, dilation_rate, n_layers,
                            pe_scale=1000):
    B, c_in, T = x.shape
    c_out = params["proj_w"].shape[1]
    henc = 2 * hidden
    dim = 2 * hidden
    henc_p = _round_up(henc, 128)          # lane-dense WN hidden width
    c_out_p = _round_up(c_out, 128)        # lane-dense output store

    # --- time conditioning path (tiny, per-batch vectors) in plain JAX ---
    temb = sinusoidal_pos_emb(t, dim, scale=pe_scale)                 # (B, dim)
    temb = mish(temb @ params["mlp_w1"] + params["mlp_b1"])
    temb = temb @ params["mlp_w2"] + params["mlp_b2"]                 # (B, dim)
    g = temb @ params["cond_w"] + params["cond_b"]                    # (B, 2*henc*nl)
    g = g.reshape(B, n_layers, 2 * henc).astype(jnp.float32)
    # fold the WN in-conv bias into g (both broadcast over the time axis)
    g = g + params["in_b"].reshape(1, n_layers, 2 * henc).astype(jnp.float32)
    g = _pad_halves_last(g, henc, henc_p)                             # (B, nl, 2*henc_p)
    g = g.reshape(B, n_layers, 1, 2 * henc_p)

    # NCL -> (B, T, C); stack [x ; mu] along T so pre() is one matmul
    x_tl = jnp.transpose(x, (0, 2, 1)).astype(jnp.float32)
    mu_tl = jnp.transpose(mu, (0, 2, 1)).astype(jnp.float32)
    xm = jnp.concatenate([x_tl, mu_tl], axis=1)                       # (B, 2T, c_in)
    m_tl = jnp.transpose(x_mask, (0, 2, 1)).astype(jnp.float32)       # (B, T, 1)

    # static per-layer dilation / halo geometry
    dils = [dilation_rate ** i for i in range(n_layers)]
    pads = [d_ * (kernel_size - 1) // 2 for d_ in dils]
    left_need = max(pads)
    right_need = max((kernel_size - 1) * d_ - p_ for d_, p_ in zip(dils, pads))
    rup8 = lambda v: -(-v // 8) * 8
    halo_l, halo_r = rup8(left_need), rup8(right_need)
    t_pad = halo_l + T + halo_r

    # --- weight prep: bf16 matmul operands, lane-dense padded channel dims,
    #     taps flattened so each layer is one (T, k*henc_p) @ (k*henc_p, 2*henc_p)
    bf = lambda a: a.astype(jnp.bfloat16)
    pre_w = bf(params["pre_w"])
    pre_b = params["pre_b"].astype(jnp.float32)

    in_w = _pad_axis_to(params["in_w"], 2, henc_p)             # pad input channels
    in_w = _pad_halves_last(in_w, henc, henc_p)                # pad tanh/sigmoid halves
    in_w = bf(in_w.reshape(n_layers, kernel_size * henc_p, 2 * henc_p))

    rs_w = _pad_axis_to(params["rs_w"], 1, henc_p)
    rs_w = bf(_pad_halves_last(rs_w, henc, henc_p))
    rs_b = _pad_halves_last(params["rs_b"].astype(jnp.float32), henc, henc_p)

    proj_w = _pad_axis_to(params["proj_w"], 0, henc_p)
    proj_w = bf(_pad_last_to(proj_w, c_out_p))
    proj_b = _pad_last_to(params["proj_b"].astype(jnp.float32), c_out_p)

    kernel = functools.partial(
        _wn_decoder_kernel, henc=henc, henc_p=henc_p, kernel_size=kernel_size,
        dilation_rate=dilation_rate, n_layers=n_layers, halo_l=halo_l)

    # --- VMEM budget from the actual resident set (weights resident once,
    #     per-batch activations double-buffered), capped by the core's VMEM ---
    def nbytes(shape, dt):
        return math.prod(shape) * jnp.dtype(dt).itemsize
    weight_bytes = (nbytes(in_w.shape, jnp.bfloat16)
                    + nbytes(rs_w.shape, jnp.bfloat16)
                    + nbytes(rs_b.shape, jnp.float32)
                    + nbytes(pre_w.shape, jnp.bfloat16)
                    + nbytes(pre_b.shape, jnp.float32)
                    + nbytes(proj_w.shape, jnp.bfloat16)
                    + nbytes(proj_b.shape, jnp.float32))
    act_bytes = (nbytes((1, 2 * T, c_in), jnp.float32)
                 + nbytes((1, T, 1), jnp.float32)
                 + nbytes((1, n_layers, 1, 2 * henc_p), jnp.float32)
                 + nbytes((1, T, c_out_p), jnp.float32))
    scratch_bytes = nbytes((t_pad, henc_p), jnp.float32)
    temp_bytes = (nbytes((T, kernel_size * henc_p), jnp.bfloat16)
                  + 4 * nbytes((T, 2 * henc_p), jnp.float32)
                  + 2 * nbytes((T, henc_p), jnp.float32))
    est = 2 * weight_bytes + 2 * act_bytes + scratch_bytes + temp_bytes
    try:
        vmem_cap = int(pltpu.get_tpu_info().vmem_capacity_bytes)
    except Exception:
        vmem_cap = 64 * 2 ** 20
    vmem_limit = int(min(max(2 * est, 16 * 2 ** 20), int(0.85 * vmem_cap)))

    grid_spec = pltpu.PrefetchScalarGridSpec(
        num_scalar_prefetch=0,
        grid=(B,),
        in_specs=[
            pl.BlockSpec((1, 2 * T, c_in), lambda b: (b, 0, 0)),               # [x ; mu]
            pl.BlockSpec((1, T, 1), lambda b: (b, 0, 0)),                      # mask
            pl.BlockSpec((1, n_layers, 1, 2 * henc_p), lambda b: (b, 0, 0, 0)),  # g(+in_b)
            pl.BlockSpec((c_in, hidden), lambda b: (0, 0)),                    # pre_w
            pl.BlockSpec((1, hidden), lambda b: (0, 0)),                       # pre_b
            pl.BlockSpec((n_layers, kernel_size * henc_p, 2 * henc_p),
                         lambda b: (0, 0, 0)),                                 # in_w (resident)
            pl.BlockSpec((n_layers, henc_p, 2 * henc_p), lambda b: (0, 0, 0)),  # rs_w (resident)
            pl.BlockSpec((n_layers, 1, 2 * henc_p), lambda b: (0, 0, 0)),      # rs_b
            pl.BlockSpec((henc_p, c_out_p), lambda b: (0, 0)),                 # proj_w
            pl.BlockSpec((1, c_out_p), lambda b: (0, 0)),                      # proj_b
        ],
        out_specs=pl.BlockSpec((1, T, c_out_p), lambda b: (b, 0, 0)),
        scratch_shapes=[
            pltpu.VMEM((t_pad, henc_p), jnp.float32),      # halo-padded hidden state
        ],
    )

    out = pl.pallas_call(
        kernel,
        out_shape=jax.ShapeDtypeStruct((B, T, c_out_p), jnp.float32),
        grid_spec=grid_spec,
        compiler_params=pltpu.CompilerParams(
            dimension_semantics=("parallel",),
            vmem_limit_bytes=vmem_limit),
    )(xm, m_tl, g, pre_w, pre_b, in_w, rs_w, rs_b, proj_w, proj_b)

    # drop the lane-padding columns and go back to (B, out_channels, T)
    return jnp.transpose(out[:, :, :c_out], (0, 2, 1))


# ----------------------------------------------------------------------------
# Pure-JAX reference (same math, bf16 matmul operands / f32 accumulation)
# ----------------------------------------------------------------------------
def reference_forward(params, x, x_mask, mu, t, *,
                      hidden, kernel_size, dilation_rate, n_layers,
                      pe_scale=1000):
    def bdot(a, w):
        return jnp.einsum("btc,cd->btd", a.astype(jnp.bfloat16),
                          w.astype(jnp.bfloat16),
                          preferred_element_type=jnp.float32)

    B, c_in, T = x.shape
    henc = 2 * hidden
    dim = 2 * hidden

    temb = sinusoidal_pos_emb(t, dim, scale=pe_scale)
    temb = mish(temb @ params["mlp_w1"] + params["mlp_b1"])
    temb = temb @ params["mlp_w2"] + params["mlp_b2"]
    g = (temb @ params["cond_w"] + params["cond_b"]).reshape(B, n_layers, 2 * henc)

    xt = jnp.transpose(x, (0, 2, 1)).astype(jnp.float32)
    mut = jnp.transpose(mu, (0, 2, 1)).astype(jnp.float32)
    m = jnp.transpose(x_mask, (0, 2, 1)).astype(jnp.float32)

    hx = (bdot(xt, params["pre_w"]) + params["pre_b"]) * m
    hm = bdot(mut, params["pre_w"]) + params["pre_b"]
    h = jnp.concatenate([hx, hm], axis=-1)

    out = jnp.zeros((B, T, henc), jnp.float32)
    for i in range(n_layers):
        d = dilation_rate ** i
        pad = d * (kernel_size - 1) // 2
        if pad > 0:
            z = jnp.zeros((B, pad, henc), jnp.float32)
            h_pad = jnp.concatenate([z, h, z], axis=1)
        else:
            h_pad = h
        acc = jnp.zeros((B, T, 2 * henc), jnp.float32)
        for j in range(kernel_size):
            xs = h_pad[:, j * d:j * d + T, :]
            acc = acc + bdot(xs, params["in_w"][i, j])
        x_in = acc + params["in_b"][i][None] + g[:, i][:, None, :]
        acts = jnp.tanh(x_in[..., :henc]) * jax.nn.sigmoid(x_in[..., henc:])
        rs = bdot(acts, params["rs_w"][i]) + params["rs_b"][i][None]
        if i < n_layers - 1:
            h = (h + rs[..., :henc]) * m
            out = out + rs[..., henc:]
        else:
            out = out + rs[..., :henc]
    out = out * m
    stats = (bdot(out, params["proj_w"]) + params["proj_b"]) * m
    return jnp.transpose(stats, (0, 2, 1))


# ----------------------------------------------------------------------------
# Deterministic parameter init (synthetic — not a checkpoint load)
# ----------------------------------------------------------------------------
def init_params(key, in_channels, out_channels, hidden, kernel_size, n_layers):
    henc = 2 * hidden
    dim = 2 * hidden
    ks = jax.random.split(key, 16)

    def w(k, shape, fan_in):
        return jax.random.normal(k, shape, jnp.float32) / jnp.sqrt(jnp.float32(fan_in))

    def b(k, shape):
        return 0.01 * jax.random.normal(k, shape, jnp.float32)

    params = {
        "mlp_w1": w(ks[0], (dim, dim * 4), dim),
        "mlp_b1": b(ks[1], (dim * 4,)),
        "mlp_w2": w(ks[2], (dim * 4, dim), dim * 4),
        "mlp_b2": b(ks[3], (dim,)),
        "pre_w": w(ks[4], (in_channels, hidden), in_channels),
        "pre_b": b(ks[5], (1, hidden)),
        "cond_w": w(ks[6], (dim, 2 * henc * n_layers), dim),
        "cond_b": b(ks[7], (2 * henc * n_layers,)),
        "in_w": w(ks[8], (n_layers, kernel_size, henc, 2 * henc), henc * kernel_size),
        "in_b": b(ks[9], (n_layers, 1, 2 * henc)),
        "rs_w": w(ks[10], (n_layers, henc, 2 * henc), henc),
        "rs_b": b(ks[11], (n_layers, 1, 2 * henc)),
        "proj_w": w(ks[12], (henc, out_channels), henc),
        "proj_b": b(ks[13], (1, out_channels)),
    }
    # Last WN layer's res_skip conv only outputs `henc` channels; emulate by
    # zeroing the extra output columns of the stacked (henc, 2*henc) weight.
    keep = jnp.concatenate([jnp.ones((henc,), jnp.float32),
                            jnp.zeros((henc,), jnp.float32)])
    params["rs_w"] = params["rs_w"].at[n_layers - 1].multiply(keep[None, :])
    params["rs_b"] = params["rs_b"].at[n_layers - 1].multiply(keep[None, :])
    return params


# ----------------------------------------------------------------------------
if __name__ == "__main__":
    B = 2
    in_channels = 4
    out_channels = 4
    hidden_channels = 16
    kernel_size = 3
    dilation_rate = 2
    n_layers = 3
    T = 16
    pe_scale = 1000

    key = jax.random.PRNGKey(0)
    kp, kx, km, kt = jax.random.split(key, 4)

    params = init_params(kp, in_channels, out_channels, hidden_channels,
                         kernel_size, n_layers)

    x = jax.random.normal(kx, (B, in_channels, T), jnp.float32)
    mu = jax.random.normal(km, (B, in_channels, T), jnp.float32)
    lengths = jnp.array([T, T - 5], dtype=jnp.int32)
    x_mask = (jnp.arange(T)[None, :] < lengths[:, None]).astype(jnp.float32)
    x_mask = x_mask[:, None, :]                       # (B, 1, T)
    t = jax.random.uniform(kt, (B,), jnp.float32)     # diffusion timestep in [0, 1)

    cfg = dict(hidden=hidden_channels, kernel_size=kernel_size,
               dilation_rate=dilation_rate, n_layers=n_layers, pe_scale=pe_scale)

    out = vits_wn_decoder_forward(params, x, x_mask, mu, t, **cfg)
    out = jax.block_until_ready(out)

    ref = reference_forward(params, x, x_mask, mu, t, **cfg)
    assert out.shape == (B, out_channels, T), out.shape
    assert bool(jnp.all(jnp.isfinite(out)))
    max_err = float(jnp.max(jnp.abs(out - ref)))
    assert jnp.allclose(out, ref, atol=5e-3, rtol=5e-3), max_err

    print("KERNEL_OK")
</pallas_src>

<mosaic_0001>
module attributes {stable_mosaic.version = 11 : i64} {
  func.func @_wn_decoder_kernel(%arg0: i32, %arg1: memref<1x32x4xf32, #tpu.memory_space<vmem>>, %arg2: memref<1x16x1xf32, #tpu.memory_space<vmem>>, %arg3: memref<1x3x1x256xf32, #tpu.memory_space<vmem>>, %arg4: memref<4x16xbf16, #tpu.memory_space<vmem>>, %arg5: memref<1x16xf32, #tpu.memory_space<vmem>>, %arg6: memref<3x384x256xbf16, #tpu.memory_space<vmem>>, %arg7: memref<3x128x256xbf16, #tpu.memory_space<vmem>>, %arg8: memref<3x1x256xf32, #tpu.memory_space<vmem>>, %arg9: memref<128x128xbf16, #tpu.memory_space<vmem>>, %arg10: memref<1x128xf32, #tpu.memory_space<vmem>>, %arg11: memref<1x16x128xf32, #tpu.memory_space<vmem>>, %arg12: memref<32x128xf32, #tpu.memory_space<vmem>>) attributes {dimension_semantics = [#tpu.dimension_semantics<parallel>], iteration_bounds = array<i64: 2>, scalar_prefetch = 0 : i64, scratch_operands = 1 : i64, tpu.core_type = #tpu.core_type<tc>, window_params = [{transform_indices = @transform_0, window_bounds = array<i64: 1, 32, 4>}, {transform_indices = @transform_1, window_bounds = array<i64: 1, 16, 1>}, {transform_indices = @transform_2, window_bounds = array<i64: 1, 3, 1, 256>}, {pipeline_mode = #tpu.pipeline_mode<synchronous>, transform_indices = @transform_3, window_bounds = array<i64: 4, 16>}, {pipeline_mode = #tpu.pipeline_mode<synchronous>, transform_indices = @transform_4, window_bounds = array<i64: 1, 16>}, {pipeline_mode = #tpu.pipeline_mode<synchronous>, transform_indices = @transform_5, window_bounds = array<i64: 3, 384, 256>}, {pipeline_mode = #tpu.pipeline_mode<synchronous>, transform_indices = @transform_6, window_bounds = array<i64: 3, 128, 256>}, {pipeline_mode = #tpu.pipeline_mode<synchronous>, transform_indices = @transform_7, window_bounds = array<i64: 3, 1, 256>}, {pipeline_mode = #tpu.pipeline_mode<synchronous>, transform_indices = @transform_8, window_bounds = array<i64: 128, 128>}, {pipeline_mode = #tpu.pipeline_mode<synchronous>, transform_indices = @transform_9, window_bounds = array<i64: 1, 128>}, {transform_indices = @transform_10, window_bounds = array<i64: 1, 16, 128>}]} {
    %c0 = arith.constant 0 : index
    %c0_0 = arith.constant 0 : index
    %c0_1 = arith.constant 0 : index
    %0 = vector.load %arg2[%c0, %c0_0, %c0_1] : memref<1x16x1xf32, #tpu.memory_space<vmem>>, vector<1x16x1xf32>
    %1 = vector.shape_cast %0 : vector<1x16x1xf32> to vector<16x1xf32>
    %cst = arith.constant 0.000000e+00 : f32
    %2 = vector.broadcast %cst : f32 to vector<32x128xf32>
    %c0_2 = arith.constant 0 : index
    %c0_3 = arith.constant 0 : index
    %3 = vector.load %arg12[%c0_2, %c0_3] : memref<32x128xf32, #tpu.memory_space<vmem>>, vector<32x128xf32>
    tpu.vector_store %arg12[%c0_2, %c0_3], %2 {strides = array<i32>} : memref<32x128xf32, #tpu.memory_space<vmem>>, vector<32x128xf32>,
    %c0_4 = arith.constant 0 : index
    %c0_5 = arith.constant 0 : index
    %c0_6 = arith.constant 0 : index
    %4 = vector.load %arg1[%c0_4, %c0_5, %c0_6] : memref<1x32x4xf32, #tpu.memory_space<vmem>>, vector<1x32x4xf32>
    %5 = vector.shape_cast %4 : vector<1x32x4xf32> to vector<32x4xf32>
    %6 = arith.truncf %5 : vector<32x4xf32> to vector<32x4xbf16>
    %c0_7 = arith.constant 0 : index
    %c0_8 = arith.constant 0 : index
    %7 = vector.load %arg4[%c0_7, %c0_8] : memref<4x16xbf16, #tpu.memory_space<vmem>>, vector<4x16xbf16>
    %cst_9 = arith.constant dense<0.000000e+00> : vector<32x16xf32>
    %8 = tpu.matmul %6, %7, %cst_9 {dimension_numbers = #tpu.dot_dimension_numbers<[1], [0], [0], [1], [0, 0, 1, 1], [], []>} : vector<32x4xbf16>, vector<4x16xbf16>, vector<32x16xf32> -> vector<32x16xf32>
    %c0_10 = arith.constant 0 : index
    %c0_11 = arith.constant 0 : index
    %9 = vector.load %arg5[%c0_10, %c0_11] : memref<1x16xf32, #tpu.memory_space<vmem>>, vector<1x16xf32>
    %10 = vector.broadcast %9 : vector<1x16xf32> to vector<32x16xf32>
    %11 = arith.addf %8, %10 : vector<32x16xf32>
    %12 = vector.extract_strided_slice %11 {offsets = [0, 0], sizes = [16, 16], strides = [1, 1]} : vector<32x16xf32> to vector<16x16xf32>
    %13 = vector.broadcast %1 : vector<16x1xf32> to vector<16x16xf32>
    %14 = arith.mulf %12, %13 : vector<16x16xf32>
    %15 = vector.extract_strided_slice %11 {offsets = [16, 0], sizes = [16, 16], strides = [1, 1]} : vector<32x16xf32> to vector<16x16xf32>
    %cst_12 = arith.constant 0.000000e+00 : f32
    %16 = vector.broadcast %cst_12 : f32 to vector<16x96xf32>
    %17 = tpu.concatenate %14, %15, %16 in 1 : vector<16x16xf32>, vector<16x16xf32>, vector<16x96xf32> -> vector<16x128xf32>
    %c8 = arith.constant 8 : index
    %c0_13 = arith.constant 0 : index
    %18 = vector.load %arg12[%c8, %c0_13] : memref<32x128xf32, #tpu.memory_space<vmem>>, vector<16x128xf32>
    tpu.vector_store %arg12[%c8, %c0_13], %17 {strides = array<i32>} : memref<32x128xf32, #tpu.memory_space<vmem>>, vector<16x128xf32>,
    %c8_14 = arith.constant 8 : index
    %c0_15 = arith.constant 0 : index
    %19 = vector.load %arg12[%c8_14, %c0_15] : memref<32x128xf32, #tpu.memory_space<vmem>>, vector<16x128xf32>
    %c7 = arith.constant 7 : index
    %c0_16 = arith.constant 0 : index
    %20 = vector.load %arg12[%c7, %c0_16] : memref<32x128xf32, #tpu.memory_space<vmem>>, vector<16x128xf32>
    %21 = arith.truncf %20 : vector<16x128xf32> to vector<16x128xbf16>
    %c8_17 = arith.constant 8 : index
    %c0_18 = arith.constant 0 : index
    %22 = vector.load %arg12[%c8_17, %c0_18] : memref<32x128xf32, #tpu.memory_space<vmem>>, vector<16x128xf32>
    %23 = arith.truncf %22 : vector<16x128xf32> to vector<16x128xbf16>
    %c9 = arith.constant 9 : index
    %c0_19 = arith.constant 0 : index
    %24 = vector.load %arg12[%c9, %c0_19] : memref<32x128xf32, #tpu.memory_space<vmem>>, vector<16x128xf32>
    %25 = arith.truncf %24 : vector<16x128xf32> to vector<16x128xbf16>
    %26 = tpu.concatenate %21, %23, %25 in 1 : vector<16x128xbf16>, vector<16x128xbf16>, vector<16x128xbf16> -> vector<16x384xbf16>
    %c0_20 = arith.constant 0 : index
    %c0_21 = arith.constant 0 : index
    %c0_22 = arith.constant 0 : index
    %27 = vector.load %arg6[%c0_20, %c0_21, %c0_22] : memref<3x384x256xbf16, #tpu.memory_space<vmem>>, vector<1x384x256xbf16>
    %28 = vector.shape_cast %27 : vector<1x384x256xbf16> to vector<384x256xbf16>
    %cst_23 = arith.constant dense<0.000000e+00> : vector<16x256xf32>
    %29 = tpu.matmul %26, %28, %cst_23 {dimension_numbers = #tpu.dot_dimension_numbers<[1], [0], [0], [1], [0, 0, 1, 1], [], []>} : vector<16x384xbf16>, vector<384x256xbf16>, vector<16x256xf32> -> vector<16x256xf32>
    %c0_24 = arith.constant 0 : index
    %c0_25 = arith.constant 0 : index
    %c0_26 = arith.constant 0 : index
    %c0_27 = arith.constant 0 : index
    %30 = vector.load %arg3[%c0_24, %c0_25, %c0_26, %c0_27] : memref<1x3x1x256xf32, #tpu.memory_space<vmem>>, vector<1x1x1x256xf32>
    %31 = vector.shape_cast %30 : vector<1x1x1x256xf32> to vector<1x256xf32>
    %32 = vector.broadcast %31 : vector<1x256xf32> to vector<16x256xf32>
    %33 = arith.addf %29, %32 : vector<16x256xf32>
    %34 = vector.extract_strided_slice %33 {offsets = [0, 0], sizes = [16, 128], strides = [1, 1]} : vector<16x256xf32> to vector<16x128xf32>
    %35 = math.tanh %34 : vector<16x128xf32>
    %36 = vector.extract_strided_slice %33 {offsets = [0, 128], sizes = [16, 128], strides = [1, 1]} : vector<16x256xf32> to vector<16x128xf32>
    %37 = arith.negf %36 : vector<16x128xf32>
    %38 = math.exp %37 : vector<16x128xf32>
    %cst_28 = arith.constant 1.000000e+00 : f32
    %39 = vector.broadcast %cst_28 : f32 to vector<16x128xf32>
    %40 = arith.addf %39, %38 : vector<16x128xf32>
    %41 = arith.divf %39, %40 : vector<16x128xf32>
    %42 = arith.mulf %35, %41 : vector<16x128xf32>
    %43 = arith.truncf %42 : vector<16x128xf32> to vector<16x128xbf16>
    %c0_29 = arith.constant 0 : index
    %c0_30 = arith.constant 0 : index
    %c0_31 = arith.constant 0 : index
    %44 = vector.load %arg7[%c0_29, %c0_30, %c0_31] : memref<3x128x256xbf16, #tpu.memory_space<vmem>>, vector<1x128x256xbf16>
    %45 = vector.shape_cast %44 : vector<1x128x256xbf16> to vector<128x256xbf16>
    %cst_32 = arith.constant dense<0.000000e+00> : vector<16x256xf32>
    %46 = tpu.matmul %43, %45, %cst_32 {dimension_numbers = #tpu.dot_dimension_numbers<[1], [0], [0], [1], [0, 0, 1, 1], [], []>} : vector<16x128xbf16>, vector<128x256xbf16>, vector<16x256xf32> -> vector<16x256xf32>
    %c0_33 = arith.constant 0 : index
    %c0_34 = arith.constant 0 : index
    %c0_35 = arith.constant 0 : index
    %47 = vector.load %arg8[%c0_33, %c0_34, %c0_35] : memref<3x1x256xf32, #tpu.memory_space<vmem>>, vector<1x1x256xf32>
    %48 = vector.shape_cast %47 : vector<1x1x256xf32> to vector<1x256xf32>
    %49 = vector.broadcast %48 : vector<1x256xf32> to vector<16x256xf32>
    %50 = arith.addf %46, %49 : vector<16x256xf32>
    %51 = vector.extract_strided_slice %50 {offsets = [0, 0], sizes = [16, 128], strides = [1, 1]} : vector<16x256xf32> to vector<16x128xf32>
    %52 = arith.addf %19, %51 : vector<16x128xf32>
    %53 = vector.broadcast %1 : vector<16x1xf32> to vector<16x128xf32>
    %54 = arith.mulf %52, %53 : vector<16x128xf32>
    %c8_36 = arith.constant 8 : index
    %c0_37 = arith.constant 0 : index
    %55 = vector.load %arg12[%c8_36, %c0_37] : memref<32x128xf32, #tpu.memory_space<vmem>>, vector<16x128xf32>
    tpu.vector_store %arg12[%c8_36, %c0_37], %54 {strides = array<i32>} : memref<32x128xf32, #tpu.memory_space<vmem>>, vector<16x128xf32>,
    %56 = vector.extract_strided_slice %50 {offsets = [0, 128], sizes = [16, 128], strides = [1, 1]} : vector<16x256xf32> to vector<16x128xf32>
    %c8_38 = arith.constant 8 : index
    %c0_39 = arith.constant 0 : index
    %57 = vector.load %arg12[%c8_38, %c0_39] : memref<32x128xf32, #tpu.memory_space<vmem>>, vector<16x128xf32>
    %c6 = arith.constant 6 : index
    %c0_40 = arith.constant 0 : index
    %58 = vector.load %arg12[%c6, %c0_40] : memref<32x128xf32, #tpu.memory_space<vmem>>, vector<16x128xf32>
    %59 = arith.truncf %58 : vector<16x128xf32> to vector<16x128xbf16>
    %c8_41 = arith.constant 8 : index
    %c0_42 = arith.constant 0 : index
    %60 = vector.load %arg12[%c8_41, %c0_42] : memref<32x128xf32, #tpu.memory_space<vmem>>, vector<16x128xf32>
    %61 = arith.truncf %60 : vector<16x128xf32> to vector<16x128xbf16>
    %c10 = arith.constant 10 : index
    %c0_43 = arith.constant 0 : index
    %62 = vector.load %arg12[%c10, %c0_43] : memref<32x128xf32, #tpu.memory_space<vmem>>, vector<16x128xf32>
    %63 = arith.truncf %62 : vector<16x128xf32> to vector<16x128xbf16>
    %64 = tpu.concatenate %59, %61, %63 in 1 : vector<16x128xbf16>, vector<16x128xbf16>, vector<16x128xbf16> -> vector<16x384xbf16>
    %c1 = arith.constant 1 : index
    %c0_44 = arith.constant 0 : index
    %c0_45 = arith.constant 0 : index
    %65 = vector.load %arg6[%c1, %c0_44, %c0_45] : memref<3x384x256xbf16, #tpu.memory_space<vmem>>, vector<1x384x256xbf16>
    %66 = vector.shape_cast %65 : vector<1x384x256xbf16> to vector<384x256xbf16>
    %cst_46 = arith.constant dense<0.000000e+00> : vector<16x256xf32>
    %67 = tpu.matmul %64, %66, %cst_46 {dimension_numbers = #tpu.dot_dimension_numbers<[1], [0], [0], [1], [0, 0, 1, 1], [], []>} : vector<16x384xbf16>, vector<384x256xbf16>, vector<16x256xf32> -> vector<16x256xf32>
    %c0_47 = arith.constant 0 : index
    %c1_48 = arith.constant 1 : index
    %c0_49 = arith.constant 0 : index
    %c0_50 = arith.constant 0 : index
    %68 = vector.load %arg3[%c0_47, %c1_48, %c0_49, %c0_50] : memref<1x3x1x256xf32, #tpu.memory_space<vmem>>, vector<1x1x1x256xf32>
    %69 = vector.shape_cast %68 : vector<1x1x1x256xf32> to vector<1x256xf32>
    %70 = vector.broadcast %69 : vector<1x256xf32> to vector<16x256xf32>
    %71 = arith.addf %67, %70 : vector<16x256xf32>
    %72 = vector.extract_strided_slice %71 {offsets = [0, 0], sizes = [16, 128], strides = [1, 1]} : vector<16x256xf32> to vector<16x128xf32>
    %73 = math.tanh %72 : vector<16x128xf32>
    %74 = vector.extract_strided_slice %71 {offsets = [0, 128], sizes = [16, 128], strides = [1, 1]} : vector<16x256xf32> to vector<16x128xf32>
    %75 = arith.negf %74 : vector<16x128xf32>
    %76 = math.exp %75 : vector<16x128xf32>
    %cst_51 = arith.constant 1.000000e+00 : f32
    %77 = vector.broadcast %cst_51 : f32 to vector<16x128xf32>
    %78 = arith.addf %77, %76 : vector<16x128xf32>
    %79 = arith.divf %77, %78 : vector<16x128xf32>
    %80 = arith.mulf %73, %79 : vector<16x128xf32>
    %81 = arith.truncf %80 : vector<16x128xf32> to vector<16x128xbf16>
    %c1_52 = arith.constant 1 : index
    %c0_53 = arith.constant 0 : index
    %c0_54 = arith.constant 0 : index
    %82 = vector.load %arg7[%c1_52, %c0_53, %c0_54] : memref<3x128x256xbf16, #tpu.memory_space<vmem>>, vector<1x128x256xbf16>
    %83 = vector.shape_cast %82 : vector<1x128x256xbf16> to vector<128x256xbf16>
    %cst_55 = arith.constant dense<0.000000e+00> : vector<16x256xf32>
    %84 = tpu.matmul %81, %83, %cst_55 {dimension_numbers = #tpu.dot_dimension_numbers<[1], [0], [0], [1], [0, 0, 1, 1], [], []>} : vector<16x128xbf16>, vector<128x256xbf16>, vector<16x256xf32> -> vector<16x256xf32>
    %c1_56 = arith.constant 1 : index
    %c0_57 = arith.constant 0 : index
    %c0_58 = arith.constant 0 : index
    %85 = vector.load %arg8[%c1_56, %c0_57, %c0_58] : memref<3x1x256xf32, #tpu.memory_space<vmem>>, vector<1x1x256xf32>
    %86 = vector.shape_cast %85 : vector<1x1x256xf32> to vector<1x256xf32>
    %87 = vector.broadcast %86 : vector<1x256xf32> to vector<16x256xf32>
    %88 = arith.addf %84, %87 : vector<16x256xf32>
    %89 = vector.extract_strided_slice %88 {offsets = [0, 0], sizes = [16, 128], strides = [1, 1]} : vector<16x256xf32> to vector<16x128xf32>
    %90 = arith.addf %57, %89 : vector<16x128xf32>
    %91 = vector.broadcast %1 : vector<16x1xf32> to vector<16x128xf32>
    %92 = arith.mulf %90, %91 : vector<16x128xf32>
    %c8_59 = arith.constant 8 : index
    %c0_60 = arith.constant 0 : index
    %93 = vector.load %arg12[%c8_59, %c0_60] : memref<32x128xf32, #tpu.memory_space<vmem>>, vector<16x128xf32>
    tpu.vector_store %arg12[%c8_59, %c0_60], %92 {strides = array<i32>} : memref<32x128xf32, #tpu.memory_space<vmem>>, vector<16x128xf32>,
    %94 = vector.extract_strided_slice %88 {offsets = [0, 128], sizes = [16, 128], strides = [1, 1]} : vector<16x256xf32> to vector<16x128xf32>
    %95 = arith.addf %56, %94 : vector<16x128xf32>
    %c4 = arith.constant 4 : index
    %c0_61 = arith.constant 0 : index
    %96 = vector.load %arg12[%c4, %c0_61] : memref<32x128xf32, #tpu.memory_space<vmem>>, vector<16x128xf32>
    %97 = arith.truncf %96 : vector<16x128xf32> to vector<16x128xbf16>
    %c8_62 = arith.constant 8 : index
    %c0_63 = arith.constant 0 : index
    %98 = vector.load %arg12[%c8_62, %c0_63] : memref<32x128xf32, #tpu.memory_space<vmem>>, vector<16x128xf32>
    %99 = arith.truncf %98 : vector<16x128xf32> to vector<16x128xbf16>
    %c12 = arith.constant 12 : index
    %c0_64 = arith.constant 0 : index
    %100 = vector.load %arg12[%c12, %c0_64] : memref<32x128xf32, #tpu.memory_space<vmem>>, vector<16x128xf32>
    %101 = arith.truncf %100 : vector<16x128xf32> to vector<16x128xbf16>
    %102 = tpu.concatenate %97, %99, %101 in 1 : vector<16x128xbf16>, vector<16x128xbf16>, vector<16x128xbf16> -> vector<16x384xbf16>
    %c2 = arith.constant 2 : index
    %c0_65 = arith.constant 0 : index
    %c0_66 = arith.constant 0 : index
    %103 = vector.load %arg6[%c2, %c0_65, %c0_66] : memref<3x384x256xbf16, #tpu.memory_space<vmem>>, vector<1x384x256xbf16>
    %104 = vector.shape_cast %103 : vector<1x384x256xbf16> to vector<384x256xbf16>
    %cst_67 = arith.constant dense<0.000000e+00> : vector<16x256xf32>
    %105 = tpu.matmul %102, %104, %cst_67 {dimension_numbers = #tpu.dot_dimension_numbers<[1], [0], [0], [1], [0, 0, 1, 1], [], []>} : vector<16x384xbf16>, vector<384x256xbf16>, vector<16x256xf32> -> vector<16x256xf32>
    %c0_68 = arith.constant 0 : index
    %c2_69 = arith.constant 2 : index
    %c0_70 = arith.constant 0 : index
    %c0_71 = arith.constant 0 : index
    %106 = vector.load %arg3[%c0_68, %c2_69, %c0_70, %c0_71] : memref<1x3x1x256xf32, #tpu.memory_space<vmem>>, vector<1x1x1x256xf32>
    %107 = vector.shape_cast %106 : vector<1x1x1x256xf32> to vector<1x256xf32>
    %108 = vector.broadcast %107 : vector<1x256xf32> to vector<16x256xf32>
    %109 = arith.addf %105, %108 : vector<16x256xf32>
    %110 = vector.extract_strided_slice %109 {offsets = [0, 0], sizes = [16, 128], strides = [1, 1]} : vector<16x256xf32> to vector<16x128xf32>
    %111 = math.tanh %110 : vector<16x128xf32>
    %112 = vector.extract_strided_slice %109 {offsets = [0, 128], sizes = [16, 128], strides = [1, 1]} : vector<16x256xf32> to vector<16x128xf32>
    %113 = arith.negf %112 : vector<16x128xf32>
    %114 = math.exp %113 : vector<16x128xf32>
    %cst_72 = arith.constant 1.000000e+00 : f32
    %115 = vector.broadcast %cst_72 : f32 to vector<16x128xf32>
    %116 = arith.addf %115, %114 : vector<16x128xf32>
    %117 = arith.divf %115, %116 : vector<16x128xf32>
    %118 = arith.mulf %111, %117 : vector<16x128xf32>
    %119 = arith.truncf %118 : vector<16x128xf32> to vector<16x128xbf16>
    %c2_73 = arith.constant 2 : index
    %c0_74 = arith.constant 0 : index
    %c0_75 = arith.constant 0 : index
    %120 = vector.load %arg7[%c2_73, %c0_74, %c0_75] : memref<3x128x256xbf16, #tpu.memory_space<vmem>>, vector<1x128x256xbf16>
    %121 = vector.shape_cast %120 : vector<1x128x256xbf16> to vector<128x256xbf16>
    %cst_76 = arith.constant dense<0.000000e+00> : vector<16x256xf32>
    %122 = tpu.matmul %119, %121, %cst_76 {dimension_numbers = #tpu.dot_dimension_numbers<[1], [0], [0], [1], [0, 0, 1, 1], [], []>} : vector<16x128xbf16>, vector<128x256xbf16>, vector<16x256xf32> -> vector<16x256xf32>
    %c2_77 = arith.constant 2 : index
    %c0_78 = arith.constant 0 : index
    %c0_79 = arith.constant 0 : index
    %123 = vector.load %arg8[%c2_77, %c0_78, %c0_79] : memref<3x1x256xf32, #tpu.memory_space<vmem>>, vector<1x1x256xf32>
    %124 = vector.shape_cast %123 : vector<1x1x256xf32> to vector<1x256xf32>
    %125 = vector.broadcast %124 : vector<1x256xf32> to vector<16x256xf32>
    %126 = arith.addf %122, %125 : vector<16x256xf32>
    %127 = vector.extract_strided_slice %126 {offsets = [0, 0], sizes = [16, 128], strides = [1, 1]} : vector<16x256xf32> to vector<16x128xf32>
    %128 = arith.addf %95, %127 : vector<16x128xf32>
    %129 = vector.broadcast %1 : vector<16x1xf32> to vector<16x128xf32>
    %130 = arith.mulf %128, %129 : vector<16x128xf32>
    %131 = arith.truncf %130 : vector<16x128xf32> to vector<16x128xbf16>
    %c0_80 = arith.constant 0 : index
    %c0_81 = arith.constant 0 : index
    %132 = vector.load %arg9[%c0_80, %c0_81] : memref<128x128xbf16, #tpu.memory_space<vmem>>, vector<128x128xbf16>
    %cst_82 = arith.constant dense<0.000000e+00> : vector<16x128xf32>
    %133 = tpu.matmul %131, %132, %cst_82 {dimension_numbers = #tpu.dot_dimension_numbers<[1], [0], [0], [1], [0, 0, 1, 1], [], []>} : vector<16x128xbf16>, vector<128x128xbf16>, vector<16x128xf32> -> vector<16x128xf32>
    %c0_83 = arith.constant 0 : index
    %c0_84 = arith.constant 0 : index
    %134 = vector.load %arg10[%c0_83, %c0_84] : memref<1x128xf32, #tpu.memory_space<vmem>>, vector<1x128xf32>
    %135 = vector.broadcast %134 : vector<1x128xf32> to vector<16x128xf32>
    %136 = arith.addf %133, %135 : vector<16x128xf32>
    %137 = vector.broadcast %1 : vector<16x1xf32> to vector<16x128xf32>
    %138 = arith.mulf %136, %137 : vector<16x128xf32>
    %c0_85 = arith.constant 0 : index
    %c0_86 = arith.constant 0 : index
    %c0_87 = arith.constant 0 : index
    %139 = vector.load %arg11[%c0_85, %c0_86, %c0_87] : memref<1x16x128xf32, #tpu.memory_space<vmem>>, vector<1x16x128xf32>
    %140 = vector.shape_cast %139 : vector<1x16x128xf32> to vector<16x128xf32>
    %141 = vector.shape_cast %138 : vector<16x128xf32> to vector<1x16x128xf32>
    tpu.vector_store %arg11[%c0_85, %c0_86, %c0_87], %141 {strides = array<i32>} : memref<1x16x128xf32, #tpu.memory_space<vmem>>, vector<1x16x128xf32>,
    return
  }
  func.func @transform_0(%arg0: i32) -> (i32, i32, i32) {
    %c0_i32 = arith.constant 0 : i32
    %c0_i32_0 = arith.constant 0 : i32
    %c0_i32_1 = arith.constant 0 : i32
    return %arg0, %c0_i32, %c0_i32_0 : i32, i32, i32
  }
  func.func @transform_1(%arg0: i32) -> (i32, i32, i32) {
    %c0_i32 = arith.constant 0 : i32
    %c0_i32_0 = arith.constant 0 : i32
    %c0_i32_1 = arith.constant 0 : i32
    return %arg0, %c0_i32, %c0_i32_0 : i32, i32, i32
  }
  func.func @transform_2(%arg0: i32) -> (i32, i32, i32, i32) {
    %c0_i32 = arith.constant 0 : i32
    %c0_i32_0 = arith.constant 0 : i32
    %c0_i32_1 = arith.constant 0 : i32
    %c0_i32_2 = arith.constant 0 : i32
    return %arg0, %c0_i32, %c0_i32_0, %c0_i32_1 : i32, i32, i32, i32
  }
  func.func @transform_3(%arg0: i32) -> (i32, i32) {
    %c0_i32 = arith.constant 0 : i32
    %c0_i32_0 = arith.constant 0 : i32
    %c0_i32_1 = arith.constant 0 : i32
    return %c0_i32, %c0_i32_0 : i32, i32
  }
  func.func @transform_4(%arg0: i32) -> (i32, i32) {
    %c0_i32 = arith.constant 0 : i32
    %c0_i32_0 = arith.constant 0 : i32
    %c0_i32_1 = arith.constant 0 : i32
    return %c0_i32, %c0_i32_0 : i32, i32
  }
  func.func @transform_5(%arg0: i32) -> (i32, i32, i32) {
    %c0_i32 = arith.constant 0 : i32
    %c0_i32_0 = arith.constant 0 : i32
    %c0_i32_1 = arith.constant 0 : i32
    %c0_i32_2 = arith.constant 0 : i32
    return %c0_i32, %c0_i32_0, %c0_i32_1 : i32, i32, i32
  }
  func.func @transform_6(%arg0: i32) -> (i32, i32, i32) {
    %c0_i32 = arith.constant 0 : i32
    %c0_i32_0 = arith.constant 0 : i32
    %c0_i32_1 = arith.constant 0 : i32
    %c0_i32_2 = arith.constant 0 : i32
    return %c0_i32, %c0_i32_0, %c0_i32_1 : i32, i32, i32
  }
  func.func @transform_7(%arg0: i32) -> (i32, i32, i32) {
    %c0_i32 = arith.constant 0 : i32
    %c0_i32_0 = arith.constant 0 : i32
    %c0_i32_1 = arith.constant 0 : i32
    %c0_i32_2 = arith.constant 0 : i32
    return %c0_i32, %c0_i32_0, %c0_i32_1 : i32, i32, i32
  }
  func.func @transform_8(%arg0: i32) -> (i32, i32) {
    %c0_i32 = arith.constant 0 : i32
    %c0_i32_0 = arith.constant 0 : i32
    %c0_i32_1 = arith.constant 0 : i32
    return %c0_i32, %c0_i32_0 : i32, i32
  }
  func.func @transform_9(%arg0: i32) -> (i32, i32) {
    %c0_i32 = arith.constant 0 : i32
    %c0_i32_0 = arith.constant 0 : i32
    %c0_i32_1 = arith.constant 0 : i32
    return %c0_i32, %c0_i32_0 : i32, i32
  }
  func.func @transform_10(%arg0: i32) -> (i32, i32, i32) {
    %c0_i32 = arith.constant 0 : i32
    %c0_i32_0 = arith.constant 0 : i32
    %c0_i32_1 = arith.constant 0 : i32
    return %arg0, %c0_i32, %c0_i32_0 : i32, i32, i32
  }
}

</mosaic_0001>

<llo_original>
// kernel: tpu_custom_call.1
$region0: #{tpu_custom_call.1}
  #allocation0 [shape = 'u32[]', space=smem, size = 0x4, offset = 0x4, fixed_abs, tag = 'smem constant byte address 0x4 - core index']
  #allocation1 [shape = 'u32[144,128]{1,0:T(1,128)}', space=vmem, size = 0x12000, scoped, tag = 'internal scratch']
  #allocation2 [shape = 'f32[32,128]{1,0:T(8,128)}', space=vmem, size = 0x4000, scoped, tag = 'scratch operand']
  %s0 = inlined_call_operand.vmem [shape: f32[2,32,4], index: 0, kind: input, shape index: {}]
  %s1 = inlined_call_operand.vmem [shape: f32[2,16,1], index: 1, kind: input, shape index: {}]
  %s2 = inlined_call_operand.vmem [shape: f32[2,3,1,256], index: 2, kind: input, shape index: {}]
  %s3 = inlined_call_operand.vmem [shape: bf16[4,16], index: 3, kind: input, shape index: {}]
  %s4 = inlined_call_operand.vmem [shape: f32[1,16], index: 4, kind: input, shape index: {}]
  %s5 = inlined_call_operand.hbm [shape: bf16[3,384,256], index: 5, kind: input, shape index: {}]
  %s6 = inlined_call_operand.hbm [shape: bf16[3,128,256], index: 6, kind: input, shape index: {}]
  %s7 = inlined_call_operand.vmem [shape: f32[3,1,256], index: 7, kind: input, shape index: {}]
  %s8 = inlined_call_operand.vmem [shape: bf16[128,128], index: 8, kind: input, shape index: {}]
  %s9 = inlined_call_operand.vmem [shape: f32[1,128], index: 9, kind: input, shape index: {}]
  %s10 = inlined_call_operand.hbm [shape: f32[2,16,128], index: 10, kind: output, shape index: {}]
  %s11 = sld [smem:[#allocation0]]
  $region81: #{tpu_custom_call.1} parent=0
    _
  %s13 = ssub.s32 1, %s11
  %s14 = scalar_select 0, %s13, %s11
  $region1: #{tpu_custom_call.1} parent=0
    #allocation3 [shape = 'u8[589824]{0}', space=vmem, size = 0x90000, scoped, tag = 'input window, operand 5, single buffered']
    #allocation4 [shape = 's32[2]{0}', space=sflag, size = 0x8, scoped, tag = 'scoped memory for tpu_custom_call.1']
    #allocation5 [shape = 's32[2]{0}', space=sflag, size = 0x8, scoped, tag = 'scoped memory for tpu_custom_call.1']
    #allocation6 [shape = 'u8[196608]{0}', space=vmem, size = 0x30000, scoped, tag = 'input window, operand 6, single buffered']
    #allocation7 [shape = 's32[1]{0}', space=sflag, size = 0x4, scoped, tag = 'scoped memory for tpu_custom_call.1']
    #allocation8 [shape = 'u8[16384]{0}', space=vmem, size = 0x4000, scoped, tag = 'output window, operand 0']
    %15 = vsyncpa [#allocation4], 0
    %16 = vsyncpa [#allocation7], 0
    %17 = vsyncpa [#allocation5], 0
    %s18 = scalar_lea.sflag [#allocation5], 1
    %19 = vsyncpa %s18, 0
    loop: start=0, step=1, limit=4
    $region2: #{tpu_custom_call.1} parent=1 // loop_pre_header
      _
    $region3: #{tpu_custom_call.1} parent=1 // loop_header
      %s21 = sphi 0, %s25
      %p22 = scmp.ge.s32.totalorder %s21, 4
      %s31 = sphi 0, %s33
      %s34 = sphi 0, %s31
      %s35 = sphi 0, %s34
      %s51 = sphi 0, %s35
      %s57 = sphi 0, %s59
      %s60 = sphi 0, %s57
      %s61 = sphi 0, %s60
      %s77 = sphi 0, %s61
      %s83 = sphi 0, %s85
      %s86 = sphi 0, %s83
      %s87 = sphi 0, %s86
      %s103 = sphi 0, %s87
      %s107 = sphi 0, %s107
      %s109 = sphi 0, %s107
      %s110 = sphi 0, %s109
      %s124 = sphi 0, %s110
      %s128 = sphi 0, %s128
      %s130 = sphi 0, %s128
      %s131 = sphi 0, %s130
      %s145 = sphi 0, %s131
      %s149 = sphi 0, %s149
      %s151 = sphi 0, %s149
      %s152 = sphi 0, %s151
      %s166 = sphi 0, %s152
      %s170 = sphi 0, %s170
      %s172 = sphi 0, %s170
      %s173 = sphi 0, %s172
      %s187 = sphi 0, %s173
      %s191 = sphi 0, %s191
      %s193 = sphi 0, %s191
      %s194 = sphi 0, %s193
      %s208 = sphi 0, %s194
      %s212 = sphi 0, %s212
      %s214 = sphi 0, %s212
      %s215 = sphi 0, %s214
      %s229 = sphi 0, %s215
      %s233 = sphi 0, %s233
      %s235 = sphi 0, %s233
      %s236 = sphi 0, %s235
      %s250 = sphi 0, %s236
      %s256 = sphi 0, %s258
      %s259 = sphi 0, %s256
      %s260 = sphi 0, %s259
      %s276 = sphi 0, %s260
    $region4: #{tpu_custom_call.1} parent=1 // loop_header_branch
      %24 = sbr.rel (%p22) target = $region8
    $region5: #{tpu_custom_call.1} parent=1 // loop_body
      %s26 = ssub.s32 %s21, 1
      %s27 = ssub.s32 %s21, 2
      %s28 = sadd.s32 %s21, 1
      %s29 = ssub.s32 %s21, %s28
      %p30 = scmp.eq.s32.totalorder %s29, 0
      %s32 = sadd.s32 %s31, 1
      %s33 = scalar_select %p30, %s31, %s32
      %p36 = pneg %p30
      %p37 = scmp.eq.s32.totalorder %s21, 1
      %p38 = por %p36, %p37
      %p39 = scmp.ne.s32.totalorder %s31, %s34
      %p40 = scmp.eq.s32.totalorder %s21, 0
      %p41 = por %p39, %p40
      %p42 = scmp.ne.s32.totalorder %s31, %s34
      %p43 = scmp.eq.s32.totalorder %s26, 1
      %p44 = por %p42, %p43
      %p45 = scmp.ne.s32.totalorder %s34, %s35
      %p46 = scmp.eq.s32.totalorder %s26, 0
      %p47 = por %p45, %p46
      %p48 = scmp.ne.s32.totalorder %s34, %s35
      %p49 = scmp.eq.s32.totalorder %s27, 1
      %p50 = por %p48, %p49
      %p52 = scmp.ne.s32.totalorder %s35, %s51
      %p53 = scmp.eq.s32.totalorder %s27, 0
      %p54 = por %p52, %p53
      %s55 = ssub.s32 %s21, %s28
      %p56 = scmp.eq.s32.totalorder %s55, 0
      %s58 = sadd.s32 %s57, 1
      %s59 = scalar_select %p56, %s57, %s58
      %p62 = pneg %p56
      %p63 = scmp.eq.s32.totalorder %s21, 1
      %p64 = por %p62, %p63
      %p65 = scmp.ne.s32.totalorder %s57, %s60
      %p66 = scmp.eq.s32.totalorder %s21, 0
      %p67 = por %p65, %p66
      %p68 = scmp.ne.s32.totalorder %s57, %s60
      %p69 = scmp.eq.s32.totalorder %s26, 1
      %p70 = por %p68, %p69
      %p71 = scmp.ne.s32.totalorder %s60, %s61
      %p72 = scmp.eq.s32.totalorder %s26, 0
      %p73 = por %p71, %p72
      %p74 = scmp.ne.s32.totalorder %s60, %s61
      %p75 = scmp.eq.s32.totalorder %s27, 1
      %p76 = por %p74, %p75
      %p78 = scmp.ne.s32.totalorder %s61, %s77
      %p79 = scmp.eq.s32.totalorder %s27, 0
      %p80 = por %p78, %p79
      %s81 = ssub.s32 %s21, %s28
      %p82 = scmp.eq.s32.totalorder %s81, 0
      %s84 = sadd.s32 %s83, 1
      %s85 = scalar_select %p82, %s83, %s84
      %p88 = pneg %p82
      %p89 = scmp.eq.s32.totalorder %s21, 1
      %p90 = por %p88, %p89
      %p91 = scmp.ne.s32.totalorder %s83, %s86
      %p92 = scmp.eq.s32.totalorder %s21, 0
      %p93 = por %p91, %p92
      %p94 = scmp.ne.s32.totalorder %s83, %s86
      %p95 = scmp.eq.s32.totalorder %s26, 1
      %p96 = por %p94, %p95
      %p97 = scmp.ne.s32.totalorder %s86, %s87
      %p98 = scmp.eq.s32.totalorder %s26, 0
      %p99 = por %p97, %p98
      %p100 = scmp.ne.s32.totalorder %s86, %s87
      %p101 = scmp.eq.s32.totalorder %s27, 1
      %p102 = por %p100, %p101
      %p104 = scmp.ne.s32.totalorder %s87, %s103
      %p105 = scmp.eq.s32.totalorder %s27, 0
      %p106 = por %p104, %p105
      %s108 = sadd.s32 %s107, 1
      %p111 = scmp.eq.s32.totalorder %s21, 1
      %p112 = scmp.ne.s32.totalorder %s107, %s109
      %p113 = scmp.eq.s32.totalorder %s21, 0
      %p114 = por %p112, %p113
      %p115 = scmp.ne.s32.totalorder %s107, %s109
      %p116 = scmp.eq.s32.totalorder %s26, 1
      %p117 = por %p115, %p116
      %p118 = scmp.ne.s32.totalorder %s109, %s110
      %p119 = scmp.eq.s32.totalorder %s26, 0
      %p120 = por %p118, %p119
      %p121 = scmp.ne.s32.totalorder %s109, %s110
      %p122 = scmp.eq.s32.totalorder %s27, 1
      %p123 = por %p121, %p122
      %p125 = scmp.ne.s32.totalorder %s110, %s124
      %p126 = scmp.eq.s32.totalorder %s27, 0
      %p127 = por %p125, %p126
      %s129 = sadd.s32 %s128, 1
      %p132 = scmp.eq.s32.totalorder %s21, 1
      %p133 = scmp.ne.s32.totalorder %s128, %s130
      %p134 = scmp.eq.s32.totalorder %s21, 0
      %p135 = por %p133, %p134
      %p136 = scmp.ne.s32.totalorder %s128, %s130
      %p137 = scmp.eq.s32.totalorder %s26, 1
      %p138 = por %p136, %p137
      %p139 = scmp.ne.s32.totalorder %s130, %s131
      %p140 = scmp.eq.s32.totalorder %s26, 0
      %p141 = por %p139, %p140
      %p142 = scmp.ne.s32.totalorder %s130, %s131
      %p143 = scmp.eq.s32.totalorder %s27, 1
      %p144 = por %p142, %p143
      %p146 = scmp.ne.s32.totalorder %s131, %s145
      %p147 = scmp.eq.s32.totalorder %s27, 0
      %p148 = por %p146, %p147
      %s150 = sadd.s32 %s149, 1
      %p153 = scmp.eq.s32.totalorder %s21, 1
      %p154 = scmp.ne.s32.totalorder %s149, %s151
      %p155 = scmp.eq.s32.totalorder %s21, 0
      %p156 = por %p154, %p155
      %p157 = scmp.ne.s32.totalorder %s149, %s151
      %p158 = scmp.eq.s32.totalorder %s26, 1
      %p159 = por %p157, %p158
      %p160 = scmp.ne.s32.totalorder %s151, %s152
      %p161 = scmp.eq.s32.totalorder %s26, 0
      %p162 = por %p160, %p161
      %p163 = scmp.ne.s32.totalorder %s151, %s152
      %p164 = scmp.eq.s32.totalorder %s27, 1
      %p165 = por %p163, %p164
      %p167 = scmp.ne.s32.totalorder %s152, %s166
      %p168 = scmp.eq.s32.totalorder %s27, 0
      %p169 = por %p167, %p168
      %s171 = sadd.s32 %s170, 1
      %p174 = scmp.eq.s32.totalorder %s21, 1
      %p175 = scmp.ne.s32.totalorder %s170, %s172
      %p176 = scmp.eq.s32.totalorder %s21, 0
      %p177 = por %p175, %p176
      %p178 = scmp.ne.s32.totalorder %s170, %s172
      %p179 = scmp.eq.s32.totalorder %s26, 1
      %p180 = por %p178, %p179
      %p181 = scmp.ne.s32.totalorder %s172, %s173
      %p182 = scmp.eq.s32.totalorder %s26, 0
      %p183 = por %p181, %p182
      %p184 = scmp.ne.s32.totalorder %s172, %s173
      %p185 = scmp.eq.s32.totalorder %s27, 1
      %p186 = por %p184, %p185
      %p188 = scmp.ne.s32.totalorder %s173, %s187
      %p189 = scmp.eq.s32.totalorder %s27, 0
      %p190 = por %p188, %p189
      %s192 = sadd.s32 %s191, 1
      %p195 = scmp.eq.s32.totalorder %s21, 1
      %p196 = scmp.ne.s32.totalorder %s191, %s193
      %p197 = scmp.eq.s32.totalorder %s21, 0
      %p198 = por %p196, %p197
      %p199 = scmp.ne.s32.totalorder %s191, %s193
      %p200 = scmp.eq.s32.totalorder %s26, 1
      %p201 = por %p199, %p200
      %p202 = scmp.ne.s32.totalorder %s193, %s194
      %p203 = scmp.eq.s32.totalorder %s26, 0
      %p204 = por %p202, %p203
      %p205 = scmp.ne.s32.totalorder %s193, %s194
      %p206 = scmp.eq.s32.totalorder %s27, 1
      %p207 = por %p205, %p206
      %p209 = scmp.ne.s32.totalorder %s194, %s208
      %p210 = scmp.eq.s32.totalorder %s27, 0
      %p211 = por %p209, %p210
      %s213 = sadd.s32 %s212, 1
      %p216 = scmp.eq.s32.totalorder %s21, 1
      %p217 = scmp.ne.s32.totalorder %s212, %s214
      %p218 = scmp.eq.s32.totalorder %s21, 0
      %p219 = por %p217, %p218
      %p220 = scmp.ne.s32.totalorder %s212, %s214
      %p221 = scmp.eq.s32.totalorder %s26, 1
      %p222 = por %p220, %p221
      %p223 = scmp.ne.s32.totalorder %s214, %s215
      %p224 = scmp.eq.s32.totalorder %s26, 0
      %p225 = por %p223, %p224
      %p226 = scmp.ne.s32.totalorder %s214, %s215
      %p227 = scmp.eq.s32.totalorder %s27, 1
      %p228 = por %p226, %p227
      %p230 = scmp.ne.s32.totalorder %s215, %s229
      %p231 = scmp.eq.s32.totalorder %s27, 0
      %p232 = por %p230, %p231
      %s234 = sadd.s32 %s233, 1
      %p237 = scmp.eq.s32.totalorder %s21, 1
      %p238 = scmp.ne.s32.totalorder %s233, %s235
      %p239 = scmp.eq.s32.totalorder %s21, 0
      %p240 = por %p238, %p239
      %p241 = scmp.ne.s32.totalorder %s233, %s235
      %p242 = scmp.eq.s32.totalorder %s26, 1
      %p243 = por %p241, %p242
      %p244 = scmp.ne.s32.totalorder %s235, %s236
      %p245 = scmp.eq.s32.totalorder %s26, 0
      %p246 = por %p244, %p245
      %p247 = scmp.ne.s32.totalorder %s235, %s236
      %p248 = scmp.eq.s32.totalorder %s27, 1
      %p249 = por %p247, %p248
      %p251 = scmp.ne.s32.totalorder %s236, %s250
      %p252 = scmp.eq.s32.totalorder %s27, 0
      %p253 = por %p251, %p252
      %s254 = ssub.s32 %s21, %s28
      %p255 = scmp.eq.s32.totalorder %s254, 0
      %s257 = sadd.s32 %s256, 1
      %s258 = scalar_select %p255, %s256, %s257
      %p261 = pneg %p255
      %p262 = scmp.eq.s32.totalorder %s21, 1
      %p263 = por %p261, %p262
      %p264 = scmp.ne.s32.totalorder %s256, %s259
      %p265 = scmp.eq.s32.totalorder %s21, 0
      %p266 = por %p264, %p265
      %p267 = scmp.ne.s32.totalorder %s256, %s259
      %p268 = scmp.eq.s32.totalorder %s26, 1
      %p269 = por %p267, %p268
      %p270 = scmp.ne.s32.totalorder %s259, %s260
      %p271 = scmp.eq.s32.totalorder %s26, 0
      %p272 = por %p270, %p271
      %p273 = scmp.ne.s32.totalorder %s259, %s260
      %p274 = scmp.eq.s32.totalorder %s27, 1
      %p275 = por %p273, %p274
      %p277 = scmp.ne.s32.totalorder %s260, %s276
      %p278 = scmp.eq.s32.totalorder %s27, 0
      %p279 = por %p277, %p278
      %p280 = scmp.le.s32.totalorder 1, %s21
      %p281 = scmp.lt.s32.totalorder %s21, 3
      %p282 = pnand %p280, %p281
      %p283 = pneg %p282
      // Predicated region
      $region9: #{tpu_custom_call.1} parent=5 // pred_check
        _
      $region10: #{tpu_custom_call.1} parent=5 // pred_check_branch
        %285 = sbr.rel (%p282) target = $region12
      $region11: #{tpu_custom_call.1} parent=5 // pred_region
        %s286 = ssub.s32 %s21, 1
        // Predicated region
        $region13: #{tpu_custom_call.1} parent=11 // pred_check
          %p287 = pneg %p120
        $region14: #{tpu_custom_call.1} parent=11 // pred_check_branch
          %289 = sbr.rel (%p287) target = $region16
        $region15: #{tpu_custom_call.1} parent=11 // pred_region
          _
        $region16: #{tpu_custom_call.1} parent=11 // pred_fallthru
          _
        // Predicated region
        $region17: #{tpu_custom_call.1} parent=11 // pred_check
          %p290 = pneg %p141
        $region18: #{tpu_custom_call.1} parent=11 // pred_check_branch
          %292 = sbr.rel (%p290) target = $region20
        $region19: #{tpu_custom_call.1} parent=11 // pred_region
          _
        $region20: #{tpu_custom_call.1} parent=11 // pred_fallthru
          _
        // Predicated region
        $region21: #{tpu_custom_call.1} parent=11 // pred_check
          %p293 = pneg %p162
        $region22: #{tpu_custom_call.1} parent=11 // pred_check_branch
          %295 = sbr.rel (%p293) target = $region24
        $region23: #{tpu_custom_call.1} parent=11 // pred_region
          %s297 = ssub.s32 18432, 18432
          %298 = vsyncadd [#allocation4], %s297
          %s299 = sshll.u32 [#allocation3], 4
          %s300 = int_to_ptr.vmem [resolvable:$true] %s299
          %305 = dma.hbm_to_vmem [thread:$0]  %s5, 18432, %s300, [#allocation4], 128, 128, 8
        $region24: #{tpu_custom_call.1} parent=11 // pred_fallthru
          _
        // Predicated region
        $region25: #{tpu_custom_call.1} parent=11 // pred_check
          %p306 = pneg %p183
        $region26: #{tpu_custom_call.1} parent=11 // pred_check_branch
          %308 = sbr.rel (%p306) target = $region28
        $region27: #{tpu_custom_call.1} parent=11 // pred_region
          %s310 = ssub.s32 6144, 6144
          %311 = vsyncadd [#allocation7], %s310
          %s312 = sshll.u32 [#allocation6], 4
          %s313 = int_to_ptr.vmem [resolvable:$true] %s312
          %318 = dma.hbm_to_vmem [thread:$0]  %s6, 6144, %s313, [#allocation7], 128, 128, 8
        $region28: #{tpu_custom_call.1} parent=11 // pred_fallthru
          _
        // Predicated region
        $region29: #{tpu_custom_call.1} parent=11 // pred_check
          %p319 = pneg %p204
        $region30: #{tpu_custom_call.1} parent=11 // pred_check_branch
          %321 = sbr.rel (%p319) target = $region32
        $region31: #{tpu_custom_call.1} parent=11 // pred_region
          _
        $region32: #{tpu_custom_call.1} parent=11 // pred_fallthru
          _
        // Predicated region
        $region33: #{tpu_custom_call.1} parent=11 // pred_check
          %p322 = pneg %p225
        $region34: #{tpu_custom_call.1} parent=11 // pred_check_branch
          %324 = sbr.rel (%p322) target = $region36
        $region35: #{tpu_custom_call.1} parent=11 // pred_region
          _
        $region36: #{tpu_custom_call.1} parent=11 // pred_fallthru
          _
        // Predicated region
        $region37: #{tpu_custom_call.1} parent=11 // pred_check
          %p325 = pneg %p246
        $region38: #{tpu_custom_call.1} parent=11 // pred_check_branch
          %327 = sbr.rel (%p325) target = $region40
        $region39: #{tpu_custom_call.1} parent=11 // pred_region
          _
        $region40: #{tpu_custom_call.1} parent=11 // pred_fallthru
          _
      $region12: #{tpu_custom_call.1} parent=5 // pred_fallthru
        _
      %p328 = scmp.lt.s32.totalorder %s21, 2
      // Predicated region
      $region41: #{tpu_custom_call.1} parent=5 // pred_check
        %p329 = pneg %p328
      $region42: #{tpu_custom_call.1} parent=5 // pred_check_branch
        %331 = sbr.rel (%p329) target = $region44
      $region43: #{tpu_custom_call.1} parent=5 // pred_region
        // Predicated region
        $region45: #{tpu_custom_call.1} parent=43 // pred_check
          %p332 = pneg %p41
        $region46: #{tpu_custom_call.1} parent=43 // pred_check_branch
          %334 = sbr.rel (%p332) target = $region48
        $region47: #{tpu_custom_call.1} parent=43 // pred_region
          %p335 = scmp.lt.s32.totalorder %s21, 1
          %s336 = scalar_select %p335, %s21, 1
          %s337 = smul.addr %s336, 4
          %s338 = smul.addr %s337, 8
          %s339 = scalar_lea.vmem %s0, %s338
        $region48: #{tpu_custom_call.1} parent=43 // pred_fallthru
          _
        // Predicated region
        $region49: #{tpu_custom_call.1} parent=43 // pred_check
          %p340 = pneg %p67
        $region50: #{tpu_custom_call.1} parent=43 // pred_check_branch
          %342 = sbr.rel (%p340) target = $region52
        $region51: #{tpu_custom_call.1} parent=43 // pred_region
          %p343 = scmp.lt.s32.totalorder %s21, 1
          %s344 = scalar_select %p343, %s21, 1
          %s345 = smul.addr %s344, 2
          %s346 = smul.addr %s345, 8
          %s347 = scalar_lea.vmem %s1, %s346
        $region52: #{tpu_custom_call.1} parent=43 // pred_fallthru
          _
        // Predicated region
        $region53: #{tpu_custom_call.1} parent=43 // pred_check
          %p348 = pneg %p93
        $region54: #{tpu_custom_call.1} parent=43 // pred_check_branch
          %350 = sbr.rel (%p348) target = $region56
        $region55: #{tpu_custom_call.1} parent=43 // pred_region
          %p351 = scmp.lt.s32.totalorder %s21, 1
          %s352 = scalar_select %p351, %s21, 1
          %s353 = smul.addr %s352, 6
          %s354 = scalar_lea.vmem %s2, %s353
        $region56: #{tpu_custom_call.1} parent=43 // pred_fallthru
          _
      $region44: #{tpu_custom_call.1} parent=5 // pred_fallthru
        _
      %p355 = scmp.le.s32.totalorder 1, %s21
      %p356 = scmp.lt.s32.totalorder %s21, 3
      %p357 = pnand %p355, %p356
      %p358 = pneg %p357
      // Predicated region
      $region57: #{tpu_custom_call.1} parent=5 // pred_check
        _
      $region58: #{tpu_custom_call.1} parent=5 // pred_check_branch
        %360 = sbr.rel (%p357) target = $region60
      $region59: #{tpu_custom_call.1} parent=5 // pred_region
        %s361 = ssub.s32 %s21, 1
        // Predicated region
        $region61: #{tpu_custom_call.1} parent=59 // pred_check
          %p362 = pneg %p162
        $region62: #{tpu_custom_call.1} parent=59 // pred_check_branch
          %364 = sbr.rel (%p362) target = $region64
        $region63: #{tpu_custom_call.1} parent=59 // pred_region
          %365 = dma.done [#allocation4], 18432
        $region64: #{tpu_custom_call.1} parent=59 // pred_fallthru
          _
        // Predicated region
        $region65: #{tpu_custom_call.1} parent=59 // pred_check
          %p366 = pneg %p183
        $region66: #{tpu_custom_call.1} parent=59 // pred_check_branch
          %368 = sbr.rel (%p366) target = $region68
        $region67: #{tpu_custom_call.1} parent=59 // pred_region
          %369 = dma.done [#allocation7], 6144
        $region68: #{tpu_custom_call.1} parent=59 // pred_fallthru
          _
        %p370 = scmp.lt.s32.totalorder %s26, 1
        %s371 = scalar_select %p370, %s26, 1
        %s372 = smul.addr %s371, 4
        %s373 = smul.addr %s372, 8
        %s374 = scalar_lea.vmem %s0, %s373
        %p375 = pneg %p47
        %p376 = pneg %p44
        %p377 = scmp.lt.s32.totalorder %s26, 1
        %s378 = scalar_select %p377, %s26, 1
        %s379 = smul.addr %s378, 2
        %s380 = smul.addr %s379, 8
        %s381 = scalar_lea.vmem %s1, %s380
        %p382 = pneg %p73
        %p383 = pneg %p70
        %p384 = scmp.lt.s32.totalorder %s26, 1
        %s385 = scalar_select %p384, %s26, 1
        %s386 = smul.addr %s385, 6
        %s387 = scalar_lea.vmem %s2, %s386
        %p388 = pneg %p99
        %p389 = pneg %p96
        %p390 = pneg %p120
        %p391 = pneg %p117
        %p392 = pneg %p141
        %p393 = pneg %p138
        %p394 = pneg %p162
        %p395 = pneg %p159
        %p396 = pneg %p183
        %p397 = pneg %p180
        %p398 = pneg %p204
        %p399 = pneg %p201
        %p400 = pneg %p225
        %p401 = pneg %p222
        %p402 = pneg %p246
        %p403 = pneg %p243
        %p404 = pneg %p272
        %p405 = pneg %p269
        %s406 = sand.u32 %s259, 1
        %s407 = scalar_lea.sflag [#allocation5], %s406
        %s408 = sand.u32 %s259, 1
        %s409 = smul.addr %s408, 16
        %s410 = scalar_lea.vmem [#allocation8], %s409
        %p411 = scmp.lt.s32.totalorder %s26, 1
        %s412 = scalar_select %p411, %s26, 1
        %s413 = smul.addr %s412, 4
        %s414 = smul.addr %s413, 8
        %s415 = scalar_lea.vmem %s0, %s414
        %p416 = scmp.lt.s32.totalorder %s26, 1
        %s417 = scalar_select %p416, %s26, 1
        %s418 = smul.addr %s417, 2
        %s419 = smul.addr %s418, 8
        %s420 = scalar_lea.vmem %s1, %s419
        %p421 = scmp.lt.s32.totalorder %s26, 1
        %s422 = scalar_select %p421, %s26, 1
        %s423 = smul.addr %s422, 6
        %s424 = scalar_lea.vmem %s2, %s423
        %v426 = vld [vmem:[%s420] sm:$0xff]
        %v427 = vld [vmem:[%s420 + $0x8] sm:$0xff]
        %428 = vst [vmem:[#allocation2] sm:$0xff] 0.0
        %429 = vst [vmem:[#allocation2 + $0x8] sm:$0xff] 0.0
        %430 = vst [vmem:[#allocation2 + $0x10] sm:$0xff] 0.0
        %431 = vst [vmem:[#allocation2 + $0x18] sm:$0xff] 0.0
        %v432 = vld [vmem:[%s415] sm:$0xff]
        %v433 = vld [vmem:[%s415 + $0x8] sm:$0xff]
        %v434 = vld [vmem:[%s415 + $0x10] sm:$0xff]
        %v435 = vld [vmem:[%s415 + $0x18] sm:$0xff]
        %v436 = vpack.c.bf16 %v433, %v432
        %v437 = vpack.c.bf16 %v435, %v434
        %v438 = vld [vmem:[%s3] sm:$0x3]
        %v439 = vld [vmem:[%s4] sm:$0x1]
        %v441 = vlaneseq
        %v442 = vshrl.u32 %v441, 7
        %v443 = vsub.s32 0, %v442
        %v444 = vrot.slane %v439, %v443
        %vm446 = vcmask 31744
        %v448 = vsel %vm446, %v436, 0
        %v451 = vsel %vm446, %v437, 0
        %vm453 = vcmask 1041408
        %v455 = vsel %vm453, %v438, 0
        %457 = vmatprep.subr.bf16.mxu0 0
        %458 = vmatpush1.bf16.msra.mxu0 %v455
        %459 = vmatprep.subr.bf16.mxu0 0
        %460 = vmatpush1.bf16.msra.mxu0 0
        %461 = vmatprep.subr.bf16.mxu0 0
        %462 = vmatpush1.bf16.msra.mxu0 0
        %463 = vmatprep.subr.bf16.mxu0 0
        %464 = vmatpush1.bf16.msra.mxu0 0
        %465 = vmatprep.subr.bf16.mxu0 0
        %466 = vmatpush1.bf16.msra.mxu0 0
        %467 = vmatprep.subr.bf16.mxu0 0
        %468 = vmatpush1.bf16.msra.mxu0 0
        %469 = vmatprep.subr.bf16.mxu0 0
        %470 = vmatpush1.bf16.msra.mxu0 0
        %471 = vmatprep.subr.bf16.mxu0 0
        %472 = vmatpush1.bf16.msra.mxu0 0
        %473 = vmatprep.subr.bf16.mxu0 0
        %474 = vmatpush1.bf16.msra.mxu0 0
        %475 = vmatprep.subr.bf16.mxu0 0
        %476 = vmatpush1.bf16.msra.mxu0 0
        %477 = vmatprep.subr.bf16.mxu0 0
        %478 = vmatpush1.bf16.msra.mxu0 0
        %479 = vmatprep.subr.bf16.mxu0 0
        %480 = vmatpush1.bf16.msra.mxu0 0
        %481 = vmatprep.subr.bf16.mxu0 0
        %482 = vmatpush1.bf16.msra.mxu0 0
        %483 = vmatprep.subr.bf16.mxu0 0
        %484 = vmatpush1.bf16.msra.mxu0 0
        %485 = vmatprep.subr.bf16.mxu0 0
        %486 = vmatpush1.bf16.msra.mxu0 0
        %487 = vmatprep.subr.bf16.mxu0 0
        %488 = vmatpush1.bf16.msra.mxu0 0
        %489 = vmatprep.mubr.bf16.mxu0 0
        %490 = vmatmul.mubr.bf16.gmra.mrb[0].mxu0 %v448
        %v491 = vpop.f32.mrb[0].mxu0
        %v492 = vadd.f32 %v444, %v491
        %v493 = vpop.f32.mrb[0].mxu0
        %v494 = vpop.f32.mrb[0].mxu0
        %v495 = vadd.f32 %v444, %v494
        %v496 = vpop.f32.mrb[0].mxu0
        %497 = vmatprep.mubr.bf16.mxu0 0
        %498 = vmatmul.mubr.bf16.gmra.mrb[0].mxu0 %v451
        %v499 = vpop.f32.mrb[0].mxu0
        %v500 = vadd.f32 %v444, %v499
        %v501 = vpop.f32.mrb[0].mxu0
        %v502 = vpop.f32.mrb[0].mxu0
        %v503 = vadd.f32 %v444, %v502
        %v504 = vpop.f32.mrb[0].mxu0
        %505 = vdwg.mxu0
        %507 = vset.pattern.permute.xlu0 0
        %508 = vperm.xlu0 %507, %v426
        %v509 = vpop.permute.xlu0 %508
        %512 = vset.pattern.permute.xlu0 0
        %513 = vperm.xlu0 %512, %v427
        %v514 = vpop.permute.xlu0 %513
        %v516 = vmul.f32 %v492, %v509
        %v517 = vmul.f32 %v495, %v514
        %520 = vrot.lane.b32.xlu0 %v500, 16
        %v521 = vpop.permute.xlu0 %520
        %522 = vrot.lane.b32.xlu0 %v503, 16
        %v523 = vpop.permute.xlu0 %522
        %vm526 = vcmask 130048
        %v527 = vsel %vm526, %v516, %v521
        %v528 = vsel %vm526, %v517, %v523
        %vm529 = vcmask 261120
        %v530 = vsel %vm529, %v527, 0.0
        %v531 = vsel %vm529, %v528, 0.0
        %532 = vst [vmem:[#allocation2 + $0x8] sm:$0xff] %v530
        %533 = vst [vmem:[#allocation2 + $0x10] sm:$0xff] %v531
        %v534 = vld [vmem:[#allocation2 + $0x8] sm:$0xff]
        %v535 = vld [vmem:[#allocation2 + $0x10] sm:$0xff]
        %v536 = vld [vmem:[#allocation2 + $0x7] sm:$0xff]
        %v537 = vld [vmem:[#allocation2 + $0xf] sm:$0xff]
        %v538 = vpack.c.bf16 %v537, %v536
        %v539 = vpack.c.bf16 %v535, %v534
        %v540 = vld [vmem:[#allocation2 + $0x9] sm:$0xff]
        %v541 = vld [vmem:[#allocation2 + $0x11] sm:$0xff]
        %v542 = vpack.c.bf16 %v541, %v540
        %v543 = vld [vmem:[#allocation3] sm:$0xff]
        %v544 = vld [vmem:[#allocation3 + $0x8] sm:$0xff]
        %v545 = vld [vmem:[#allocation3 + $0x10] sm:$0xff]
        %v546 = vld [vmem:[#allocation3 + $0x18] sm:$0xff]
        %v547 = vld [vmem:[#allocation3 + $0x20] sm:$0xff]
        %v548 = vld [vmem:[#allocation3 + $0x28] sm:$0xff]
        %v549 = vld [vmem:[#allocation3 + $0x30] sm:$0xff]
        %v550 = vld [vmem:[#allocation3 + $0x38] sm:$0xff]
        %v551 = vld [vmem:[#allocation3 + $0x40] sm:$0xff]
        %v552 = vld [vmem:[#allocation3 + $0x48] sm:$0xff]
        %v553 = vld [vmem:[#allocation3 + $0x50] sm:$0xff]
        %v554 = vld [vmem:[#allocation3 + $0x58] sm:$0xff]
        %v555 = vld [vmem:[#allocation3 + $0x60] sm:$0xff]
        %v556 = vld [vmem:[#allocation3 + $0x68] sm:$0xff]
        %v557 = vld [vmem:[#allocation3 + $0x70] sm:$0xff]
        %v558 = vld [vmem:[#allocation3 + $0x78] sm:$0xff]
        %v559 = vld [vmem:[#allocation3 + $0x80] sm:$0xff]
        %v560 = vld [vmem:[#allocation3 + $0x88] sm:$0xff]
        %v561 = vld [vmem:[#allocation3 + $0x90] sm:$0xff]
        %v562 = vld [vmem:[#allocation3 + $0x98] sm:$0xff]
        %v563 = vld [vmem:[#allocation3 + $0xa0] sm:$0xff]
        %v564 = vld [vmem:[#allocation3 + $0xa8] sm:$0xff]
        %v565 = vld [vmem:[#allocation3 + $0xb0] sm:$0xff]
        %v566 = vld [vmem:[#allocation3 + $0xb8] sm:$0xff]
        %v567 = vld [vmem:[#allocation3 + $0xc0] sm:$0xff]
        %v568 = vld [vmem:[#allocation3 + $0xc8] sm:$0xff]
        %v569 = vld [vmem:[#allocation3 + $0xd0] sm:$0xff]
        %v570 = vld [vmem:[#allocation3 + $0xd8] sm:$0xff]
        %v571 = vld [vmem:[#allocation3 + $0xe0] sm:$0xff]
        %v572 = vld [vmem:[#allocation3 + $0xe8] sm:$0xff]
        %v573 = vld [vmem:[#allocation3 + $0xf0] sm:$0xff]
        %v574 = vld [vmem:[#allocation3 + $0xf8] sm:$0xff]
        %v575 = vld [vmem:[#allocation3 + $0x100] sm:$0xff]
        %v576 = vld [vmem:[#allocation3 + $0x108] sm:$0xff]
        %v577 = vld [vmem:[#allocation3 + $0x110] sm:$0xff]
        %v578 = vld [vmem:[#allocation3 + $0x118] sm:$0xff]
        %v579 = vld [vmem:[#allocation3 + $0x120] sm:$0xff]
        %v580 = vld [vmem:[#allocation3 + $0x128] sm:$0xff]
        %v581 = vld [vmem:[#allocation3 + $0x130] sm:$0xff]
        %v582 = vld [vmem:[#allocation3 + $0x138] sm:$0xff]
        %v583 = vld [vmem:[#allocation3 + $0x140] sm:$0xff]
        %v584 = vld [vmem:[#allocation3 + $0x148] sm:$0xff]
        %v585 = vld [vmem:[#allocation3 + $0x150] sm:$0xff]
        %v586 = vld [vmem:[#allocation3 + $0x158] sm:$0xff]
        %v587 = vld [vmem:[#allocation3 + $0x160] sm:$0xff]
        %v588 = vld [vmem:[#allocation3 + $0x168] sm:$0xff]
        %v589 = vld [vmem:[#allocation3 + $0x170] sm:$0xff]
        %v590 = vld [vmem:[#allocation3 + $0x178] sm:$0xff]
        %v591 = vld [vmem:[%s424] sm:$0x3]
        %v593 = vlaneseq
        %v594 = vshrl.u32 %v593, 7
        %v595 = vsub.s32 0, %v594
        %v596 = vrot.slane %v591, %v595
        %v597 = vlaneseq
        %v598 = vshrl.u32 %v597, 7
        %v599 = vsub.s32 1, %v598
        %v600 = vrot.slane %v591, %v599
        %v651 = vunpack.c.l.b16 %v543
        %v652 = vunpack.c.h.b16 %v543
        %v653 = vunpack.c.l.b16 %v544
        %v654 = vunpack.c.h.b16 %v544
        %v655 = vunpack.c.l.b16 %v545
        %v656 = vunpack.c.h.b16 %v545
        %v657 = vunpack.c.l.b16 %v546
        %v658 = vunpack.c.h.b16 %v546
        %v659 = vunpack.c.l.b16 %v547
        %v660 = vunpack.c.h.b16 %v547
        %v661 = vunpack.c.l.b16 %v548
        %v662 = vunpack.c.h.b16 %v548
        %v663 = vunpack.c.l.b16 %v549
        %v664 = vunpack.c.h.b16 %v549
        %v665 = vunpack.c.l.b16 %v550
        %v666 = vunpack.c.h.b16 %v550
        %v667 = vunpack.c.l.b16 %v551
        %v668 = vunpack.c.h.b16 %v551
        %v669 = vunpack.c.l.b16 %v552
        %v670 = vunpack.c.h.b16 %v552
        %v671 = vunpack.c.l.b16 %v553
        %v672 = vunpack.c.h.b16 %v553
        %v673 = vunpack.c.l.b16 %v554
        %v674 = vunpack.c.h.b16 %v554
        %v675 = vunpack.c.l.b16 %v555
        %v676 = vunpack.c.h.b16 %v555
        %v677 = vunpack.c.l.b16 %v556
        %v678 = vunpack.c.h.b16 %v556
        %v679 = vunpack.c.l.b16 %v557
        %v680 = vunpack.c.h.b16 %v557
        %v681 = vunpack.c.l.b16 %v558
        %v682 = vunpack.c.h.b16 %v558
        %v683 = vunpack.c.l.b16 %v559
        %v684 = vunpack.c.h.b16 %v559
        %v685 = vunpack.c.l.b16 %v560
        %v686 = vunpack.c.h.b16 %v560
        %v687 = vunpack.c.l.b16 %v561
        %v688 = vunpack.c.h.b16 %v561
        %v689 = vunpack.c.l.b16 %v562
        %v690 = vunpack.c.h.b16 %v562
        %v691 = vunpack.c.l.b16 %v563
        %v692 = vunpack.c.h.b16 %v563
        %v693 = vunpack.c.l.b16 %v564
        %v694 = vunpack.c.h.b16 %v564
        %v695 = vunpack.c.l.b16 %v565
        %v696 = vunpack.c.h.b16 %v565
        %v697 = vunpack.c.l.b16 %v566
        %v698 = vunpack.c.h.b16 %v566
        %v699 = vunpack.c.l.b16 %v567
        %v700 = vunpack.c.h.b16 %v567
        %v701 = vunpack.c.l.b16 %v568
        %v702 = vunpack.c.h.b16 %v568
        %v703 = vunpack.c.l.b16 %v569
        %v704 = vunpack.c.h.b16 %v569
        %v705 = vunpack.c.l.b16 %v570
        %v706 = vunpack.c.h.b16 %v570
        %v707 = vunpack.c.l.b16 %v571
        %v708 = vunpack.c.h.b16 %v571
        %v709 = vunpack.c.l.b16 %v572
        %v710 = vunpack.c.h.b16 %v572
        %v711 = vunpack.c.l.b16 %v573
        %v712 = vunpack.c.h.b16 %v573
        %v713 = vunpack.c.l.b16 %v574
        %v714 = vunpack.c.h.b16 %v574
        %v715 = vunpack.c.l.b16 %v575
        %v716 = vunpack.c.h.b16 %v575
        %v717 = vunpack.c.l.b16 %v576
        %v718 = vunpack.c.h.b16 %v576
        %v719 = vunpack.c.l.b16 %v577
        %v720 = vunpack.c.h.b16 %v577
        %v721 = vunpack.c.l.b16 %v578
        %v722 = vunpack.c.h.b16 %v578
        %v723 = vunpack.c.l.b16 %v579
        %v724 = vunpack.c.h.b16 %v579
        %v725 = vunpack.c.l.b16 %v580
        %v726 = vunpack.c.h.b16 %v580
        %v727 = vunpack.c.l.b16 %v581
        %v728 = vunpack.c.h.b16 %v581
        %v729 = vunpack.c.l.b16 %v582
        %v730 = vunpack.c.h.b16 %v582
        %v731 = vunpack.c.l.b16 %v583
        %v732 = vunpack.c.h.b16 %v583
        %v733 = vunpack.c.l.b16 %v584
        %v734 = vunpack.c.h.b16 %v584
        %v735 = vunpack.c.l.b16 %v585
        %v736 = vunpack.c.h.b16 %v585
        %v737 = vunpack.c.l.b16 %v586
        %v738 = vunpack.c.h.b16 %v586
        %v739 = vunpack.c.l.b16 %v587
        %v740 = vunpack.c.h.b16 %v587
        %v741 = vunpack.c.l.b16 %v588
        %v742 = vunpack.c.h.b16 %v588
        %v743 = vunpack.c.l.b16 %v589
        %v744 = vunpack.c.h.b16 %v589
        %v745 = vunpack.c.l.b16 %v590
        %v746 = vunpack.c.h.b16 %v590
        %v747 = vpack.c.b16 %v653, %v651
        %v748 = vpack.c.b16 %v654, %v652
        %v749 = vpack.c.b16 %v657, %v655
        %v750 = vpack.c.b16 %v658, %v656
        %v751 = vpack.c.b16 %v661, %v659
        %v752 = vpack.c.b16 %v662, %v660
        %v753 = vpack.c.b16 %v665, %v663
        %v754 = vpack.c.b16 %v666, %v664
        %v755 = vpack.c.b16 %v669, %v667
        %v756 = vpack.c.b16 %v670, %v668
        %v757 = vpack.c.b16 %v673, %v671
        %v758 = vpack.c.b16 %v674, %v672
        %v759 = vpack.c.b16 %v677, %v675
        %v760 = vpack.c.b16 %v678, %v676
        %v761 = vpack.c.b16 %v681, %v679
        %v762 = vpack.c.b16 %v682, %v680
        %v763 = vpack.c.b16 %v685, %v683
        %v764 = vpack.c.b16 %v686, %v684
        %v765 = vpack.c.b16 %v689, %v687
        %v766 = vpack.c.b16 %v690, %v688
        %v767 = vpack.c.b16 %v693, %v691
        %v768 = vpack.c.b16 %v694, %v692
        %v769 = vpack.c.b16 %v697, %v695
        %v770 = vpack.c.b16 %v698, %v696
        %v771 = vpack.c.b16 %v701, %v699
        %v772 = vpack.c.b16 %v702, %v700
        %v773 = vpack.c.b16 %v705, %v703
        %v774 = vpack.c.b16 %v706, %v704
        %v775 = vpack.c.b16 %v709, %v707
        %v776 = vpack.c.b16 %v710, %v708
        %v777 = vpack.c.b16 %v713, %v711
        %v778 = vpack.c.b16 %v714, %v712
        %v779 = vpack.c.b16 %v717, %v715
        %v780 = vpack.c.b16 %v718, %v716
        %v781 = vpack.c.b16 %v721, %v719
        %v782 = vpack.c.b16 %v722, %v720
        %v783 = vpack.c.b16 %v725, %v723
        %v784 = vpack.c.b16 %v726, %v724
        %v785 = vpack.c.b16 %v729, %v727
        %v786 = vpack.c.b16 %v730, %v728
        %v787 = vpack.c.b16 %v733, %v731
        %v788 = vpack.c.b16 %v734, %v732
        %v789 = vpack.c.b16 %v737, %v735
        %v790 = vpack.c.b16 %v738, %v736
        %v791 = vpack.c.b16 %v741, %v739
        %v792 = vpack.c.b16 %v742, %v740
        %v793 = vpack.c.b16 %v745, %v743
        %v794 = vpack.c.b16 %v746, %v744
        %843 = vmatprep.subr.bf16.mxu0 %v748
        %844 = vmatpush1.bf16.msra.mxu0 %v747
        %845 = vmatprep.subr.bf16.mxu0 %v750
        %846 = vmatpush1.bf16.msra.mxu0 %v749
        %847 = vmatprep.subr.bf16.mxu0 %v752
        %848 = vmatpush1.bf16.msra.mxu0 %v751
        %849 = vmatprep.subr.bf16.mxu0 %v754
        %850 = vmatpush1.bf16.msra.mxu0 %v753
        %851 = vmatprep.subr.bf16.mxu0 %v756
        %852 = vmatpush1.bf16.msra.mxu0 %v755
        %853 = vmatprep.subr.bf16.mxu0 %v758
        %854 = vmatpush1.bf16.msra.mxu0 %v757
        %855 = vmatprep.subr.bf16.mxu0 %v760
        %856 = vmatpush1.bf16.msra.mxu0 %v759
        %857 = vmatprep.subr.bf16.mxu0 %v762
        %858 = vmatpush1.bf16.msra.mxu0 %v761
        %859 = vmatprep.subr.bf16.mxu0 %v764
        %860 = vmatpush1.bf16.msra.mxu0 %v763
        %861 = vmatprep.subr.bf16.mxu0 %v766
        %862 = vmatpush1.bf16.msra.mxu0 %v765
        %863 = vmatprep.subr.bf16.mxu0 %v768
        %864 = vmatpush1.bf16.msra.mxu0 %v767
        %865 = vmatprep.subr.bf16.mxu0 %v770
        %866 = vmatpush1.bf16.msra.mxu0 %v769
        %867 = vmatprep.subr.bf16.mxu0 %v772
        %868 = vmatpush1.bf16.msra.mxu0 %v771
        %869 = vmatprep.subr.bf16.mxu0 %v774
        %870 = vmatpush1.bf16.msra.mxu0 %v773
        %871 = vmatprep.subr.bf16.mxu0 %v776
        %872 = vmatpush1.bf16.msra.mxu0 %v775
        %873 = vmatprep.subr.bf16.mxu0 %v778
        %874 = vmatpush1.bf16.msra.mxu0 %v777
        %875 = vmatprep.mubr.bf16.mxu0 %v539
        %876 = vmatmul.mubr.bf16.gmra.mrb[0].mxu0 %v538
        %v877 = vpop.f32.mrb[0].mxu0
        %v878 = vadd.f32 %v596, %v877
        %v879 = vpop.f32.mrb[0].mxu0
        %v880 = vadd.f32 %v600, %v879
        %v881 = vpop.f32.mrb[0].mxu0
        %v882 = vadd.f32 %v596, %v881
        %v883 = vpop.f32.mrb[0].mxu0
        %v884 = vadd.f32 %v600, %v883
        %885 = vdwg.mxu0
        %886 = vmatprep.subr.bf16.mxu0 %v780
        %887 = vmatpush1.bf16.msra.mxu0 %v779
        %888 = vmatprep.subr.bf16.mxu0 %v782
        %889 = vmatpush1.bf16.msra.mxu0 %v781
        %890 = vmatprep.subr.bf16.mxu0 %v784
        %891 = vmatpush1.bf16.msra.mxu0 %v783
        %892 = vmatprep.subr.bf16.mxu0 %v786
        %893 = vmatpush1.bf16.msra.mxu0 %v785
        %894 = vmatprep.subr.bf16.mxu0 %v788
        %895 = vmatpush1.bf16.msra.mxu0 %v787
        %896 = vmatprep.subr.bf16.mxu0 %v790
        %897 = vmatpush1.bf16.msra.mxu0 %v789
        %898 = vmatprep.subr.bf16.mxu0 %v792
        %899 = vmatpush1.bf16.msra.mxu0 %v791
        %900 = vmatprep.subr.bf16.mxu0 %v794
        %901 = vmatpush1.bf16.msra.mxu0 %v793
        %902 = vmatprep.subr.bf16.mxu0 0
        %903 = vmatpush1.bf16.msra.mxu0 0
        %904 = vmatprep.subr.bf16.mxu0 0
        %905 = vmatpush1.bf16.msra.mxu0 0
        %906 = vmatprep.subr.bf16.mxu0 0
        %907 = vmatpush1.bf16.msra.mxu0 0
        %908 = vmatprep.subr.bf16.mxu0 0
        %909 = vmatpush1.bf16.msra.mxu0 0
        %910 = vmatprep.subr.bf16.mxu0 0
        %911 = vmatpush1.bf16.msra.mxu0 0
        %912 = vmatprep.subr.bf16.mxu0 0
        %913 = vmatpush1.bf16.msra.mxu0 0
        %914 = vmatprep.subr.bf16.mxu0 0
        %915 = vmatpush1.bf16.msra.mxu0 0
        %916 = vmatprep.subr.bf16.mxu0 0
        %917 = vmatpush1.bf16.msra.mxu0 0
        %918 = vmatprep.mubr.bf16.mxu0 0
        %919 = vmatmul.mubr.bf16.gmra.mrb[0].mxu0 %v542
        %v920 = vpop.f32.mrb[0].mxu0
        %v921 = vadd.f32 %v878, %v920
        %v922 = vpop.f32.mrb[0].mxu0
        %v923 = vadd.f32 %v880, %v922
        %v924 = vpop.f32.mrb[0].mxu0
        %v925 = vadd.f32 %v882, %v924
        %v926 = vpop.f32.mrb[0].mxu0
        %v927 = vadd.f32 %v884, %v926
        %928 = vdwg.mxu0
        %v929 = vtanh.pop %v921
        %v930 = vtanh.pop %v925
        %v931 = vxor.u32 %v923, 2147483648
        %v932 = vxor.u32 %v927, 2147483648
        %v933 = vmul.f32 %v931, 1.442695
        %v934 = vpow.pop %v933
        %v935 = vmul.f32 %v932, 1.442695
        %v936 = vpow.pop %v935
        %v937 = vadd.f32 %v934, 1.0
        %v938 = vadd.f32 %v936, 1.0
        %v939 = vrcp.pop %v937
        %v940 = vmul.f32 1.0, %v939
        %v941 = vrcp.pop %v938
        %v942 = vmul.f32 1.0, %v941
        %v943 = vmul.f32 %v929, %v940
        %v944 = vmul.f32 %v930, %v942
        %v945 = vpack.c.bf16 %v944, %v943
        %v946 = vld [vmem:[#allocation6] sm:$0xff]
        %v947 = vld [vmem:[#allocation6 + $0x8] sm:$0xff]
        %v948 = vld [vmem:[#allocation6 + $0x10] sm:$0xff]
        %v949 = vld [vmem:[#allocation6 + $0x18] sm:$0xff]
        %v950 = vld [vmem:[#allocation6 + $0x20] sm:$0xff]
        %v951 = vld [vmem:[#allocation6 + $0x28] sm:$0xff]
        %v952 = vld [vmem:[#allocation6 + $0x30] sm:$0xff]
        %v953 = vld [vmem:[#allocation6 + $0x38] sm:$0xff]
        %v954 = vld [vmem:[#allocation6 + $0x40] sm:$0xff]
        %v955 = vld [vmem:[#allocation6 + $0x48] sm:$0xff]
        %v956 = vld [vmem:[#allocation6 + $0x50] sm:$0xff]
        %v957 = vld [vmem:[#allocation6 + $0x58] sm:$0xff]
        %v958 = vld [vmem:[#allocation6 + $0x60] sm:$0xff]
        %v959 = vld [vmem:[#allocation6 + $0x68] sm:$0xff]
        %v960 = vld [vmem:[#allocation6 + $0x70] sm:$0xff]
        %v961 = vld [vmem:[#allocation6 + $0x78] sm:$0xff]
        %v962 = vld [vmem:[%s7] sm:$0x3]
        %v964 = vlaneseq
        %v965 = vshrl.u32 %v964, 7
        %v966 = vsub.s32 0, %v965
        %v967 = vrot.slane %v962, %v966
        %v968 = vlaneseq
        %v969 = vshrl.u32 %v968, 7
        %v970 = vsub.s32 1, %v969
        %v971 = vrot.slane %v962, %v970
        %v990 = vunpack.c.l.b16 %v946
        %v991 = vunpack.c.h.b16 %v946
        %v992 = vunpack.c.l.b16 %v947
        %v993 = vunpack.c.h.b16 %v947
        %v994 = vunpack.c.l.b16 %v948
        %v995 = vunpack.c.h.b16 %v948
        %v996 = vunpack.c.l.b16 %v949
        %v997 = vunpack.c.h.b16 %v949
        %v998 = vunpack.c.l.b16 %v950
        %v999 = vunpack.c.h.b16 %v950
        %v1000 = vunpack.c.l.b16 %v951
        %v1001 = vunpack.c.h.b16 %v951
        %v1002 = vunpack.c.l.b16 %v952
        %v1003 = vunpack.c.h.b16 %v952
        %v1004 = vunpack.c.l.b16 %v953
        %v1005 = vunpack.c.h.b16 %v953
        %v1006 = vunpack.c.l.b16 %v954
        %v1007 = vunpack.c.h.b16 %v954
        %v1008 = vunpack.c.l.b16 %v955
        %v1009 = vunpack.c.h.b16 %v955
        %v1010 = vunpack.c.l.b16 %v956
        %v1011 = vunpack.c.h.b16 %v956
        %v1012 = vunpack.c.l.b16 %v957
        %v1013 = vunpack.c.h.b16 %v957
        %v1014 = vunpack.c.l.b16 %v958
        %v1015 = vunpack.c.h.b16 %v958
        %v1016 = vunpack.c.l.b16 %v959
        %v1017 = vunpack.c.h.b16 %v959
        %v1018 = vunpack.c.l.b16 %v960
        %v1019 = vunpack.c.h.b16 %v960
        %v1020 = vunpack.c.l.b16 %v961
        %v1021 = vunpack.c.h.b16 %v961
        %v1022 = vpack.c.b16 %v992, %v990
        %v1023 = vpack.c.b16 %v993, %v991
        %v1024 = vpack.c.b16 %v996, %v994
        %v1025 = vpack.c.b16 %v997, %v995
        %v1026 = vpack.c.b16 %v1000, %v998
        %v1027 = vpack.c.b16 %v1001, %v999
        %v1028 = vpack.c.b16 %v1004, %v1002
        %v1029 = vpack.c.b16 %v1005, %v1003
        %v1030 = vpack.c.b16 %v1008, %v1006
        %v1031 = vpack.c.b16 %v1009, %v1007
        %v1032 = vpack.c.b16 %v1012, %v1010
        %v1033 = vpack.c.b16 %v1013, %v1011
        %v1034 = vpack.c.b16 %v1016, %v1014
        %v1035 = vpack.c.b16 %v1017, %v1015
        %v1036 = vpack.c.b16 %v1020, %v1018
        %v1037 = vpack.c.b16 %v1021, %v1019
        %1054 = vmatprep.subr.bf16.mxu0 %v1023
        %1055 = vmatpush1.bf16.msra.mxu0 %v1022
        %1056 = vmatprep.subr.bf16.mxu0 %v1025
        %1057 = vmatpush1.bf16.msra.mxu0 %v1024
        %1058 = vmatprep.subr.bf16.mxu0 %v1027
        %1059 = vmatpush1.bf16.msra.mxu0 %v1026
        %1060 = vmatprep.subr.bf16.mxu0 %v1029
        %1061 = vmatpush1.bf16.msra.mxu0 %v1028
        %1062 = vmatprep.subr.bf16.mxu0 %v1031
        %1063 = vmatpush1.bf16.msra.mxu0 %v1030
        %1064 = vmatprep.subr.bf16.mxu0 %v1033
        %1065 = vmatpush1.bf16.msra.mxu0 %v1032
        %1066 = vmatprep.subr.bf16.mxu0 %v1035
        %1067 = vmatpush1.bf16.msra.mxu0 %v1034
        %1068 = vmatprep.subr.bf16.mxu0 %v1037
        %1069 = vmatpush1.bf16.msra.mxu0 %v1036
        %1070 = vmatprep.subr.bf16.mxu0 0
        %1071 = vmatpush1.bf16.msra.mxu0 0
        %1072 = vmatprep.subr.bf16.mxu0 0
        %1073 = vmatpush1.bf16.msra.mxu0 0
        %1074 = vmatprep.subr.bf16.mxu0 0
        %1075 = vmatpush1.bf16.msra.mxu0 0
        %1076 = vmatprep.subr.bf16.mxu0 0
        %1077 = vmatpush1.bf16.msra.mxu0 0
        %1078 = vmatprep.subr.bf16.mxu0 0
        %1079 = vmatpush1.bf16.msra.mxu0 0
        %1080 = vmatprep.subr.bf16.mxu0 0
        %1081 = vmatpush1.bf16.msra.mxu0 0
        %1082 = vmatprep.subr.bf16.mxu0 0
        %1083 = vmatpush1.bf16.msra.mxu0 0
        %1084 = vmatprep.subr.bf16.mxu0 0
        %1085 = vmatpush1.bf16.msra.mxu0 0
        %1086 = vmatprep.mubr.bf16.mxu0 0
        %1087 = vmatmul.mubr.bf16.gmra.mrb[0].mxu0 %v945
        %v1088 = vpop.f32.mrb[0].mxu0
        %v1089 = vadd.f32 %v967, %v1088
        %v1090 = vpop.f32.mrb[0].mxu0
        %v1091 = vadd.f32 %v971, %v1090
        %v1092 = vpop.f32.mrb[0].mxu0
        %v1093 = vadd.f32 %v967, %v1092
        %v1094 = vpop.f32.mrb[0].mxu0
        %v1095 = vadd.f32 %v971, %v1094
        %1096 = vdwg.mxu0
        %v1097 = vadd.f32 %v534, %v1089
        %v1098 = vadd.f32 %v535, %v1093
        %v1099 = vmul.f32 %v1097, %v509
        %v1100 = vmul.f32 %v1098, %v514
        %1101 = vst [vmem:[#allocation2 + $0x8] sm:$0xff] %v1099
        %1102 = vst [vmem:[#allocation2 + $0x10] sm:$0xff] %v1100
        %v1103 = vld [vmem:[#allocation2 + $0x8] sm:$0xff]
        %v1104 = vld [vmem:[#allocation2 + $0x10] sm:$0xff]
        %v1105 = vld [vmem:[#allocation2 + $0x6] sm:$0xff]
        %v1106 = vld [vmem:[#allocation2 + $0xe] sm:$0xff]
        %v1107 = vpack.c.bf16 %v1106, %v1105
        %v1108 = vpack.c.bf16 %v1104, %v1103
        %v1109 = vld [vmem:[#allocation2 + $0xa] sm:$0xff]
        %v1110 = vld [vmem:[#allocation2 + $0x12] sm:$0xff]
        %v1111 = vpack.c.bf16 %v1110, %v1109
        %s1112 = scalar_lea.vmem [#allocation3], 384
        %v1113 = vld [vmem:[%s1112] sm:$0xff]
        %v1114 = vld [vmem:[%s1112 + $0x8] sm:$0xff]
        %v1115 = vld [vmem:[%s1112 + $0x10] sm:$0xff]
        %v1116 = vld [vmem:[%s1112 + $0x18] sm:$0xff]
        %v1117 = vld [vmem:[%s1112 + $0x20] sm:$0xff]
        %v1118 = vld [vmem:[%s1112 + $0x28] sm:$0xff]
        %v1119 = vld [vmem:[%s1112 + $0x30] sm:$0xff]
        %v1120 = vld [vmem:[%s1112 + $0x38] sm:$0xff]
        %v1121 = vld [vmem:[%s1112 + $0x40] sm:$0xff]
        %v1122 = vld [vmem:[%s1112 + $0x48] sm:$0xff]
        %v1123 = vld [vmem:[%s1112 + $0x50] sm:$0xff]
        %v1124 = vld [vmem:[%s1112 + $0x58] sm:$0xff]
        %v1125 = vld [vmem:[%s1112 + $0x60] sm:$0xff]
        %v1126 = vld [vmem:[%s1112 + $0x68] sm:$0xff]
        %v1127 = vld [vmem:[%s1112 + $0x70] sm:$0xff]
        %v1128 = vld [vmem:[%s1112 + $0x78] sm:$0xff]
        %v1129 = vld [vmem:[%s1112 + $0x80] sm:$0xff]
        %v1130 = vld [vmem:[%s1112 + $0x88] sm:$0xff]
        %v1131 = vld [vmem:[%s1112 + $0x90] sm:$0xff]
        %v1132 = vld [vmem:[%s1112 + $0x98] sm:$0xff]
        %v1133 = vld [vmem:[%s1112 + $0xa0] sm:$0xff]
        %v1134 = vld [vmem:[%s1112 + $0xa8] sm:$0xff]
        %v1135 = vld [vmem:[%s1112 + $0xb0] sm:$0xff]
        %v1136 = vld [vmem:[%s1112 + $0xb8] sm:$0xff]
        %v1137 = vld [vmem:[%s1112 + $0xc0] sm:$0xff]
        %v1138 = vld [vmem:[%s1112 + $0xc8] sm:$0xff]
        %v1139 = vld [vmem:[%s1112 + $0xd0] sm:$0xff]
        %v1140 = vld [vmem:[%s1112 + $0xd8] sm:$0xff]
        %v1141 = vld [vmem:[%s1112 + $0xe0] sm:$0xff]
        %v1142 = vld [vmem:[%s1112 + $0xe8] sm:$0xff]
        %v1143 = vld [vmem:[%s1112 + $0xf0] sm:$0xff]
        %v1144 = vld [vmem:[%s1112 + $0xf8] sm:$0xff]
        %v1145 = vld [vmem:[%s1112 + $0x100] sm:$0xff]
        %v1146 = vld [vmem:[%s1112 + $0x108] sm:$0xff]
        %v1147 = vld [vmem:[%s1112 + $0x110] sm:$0xff]
        %v1148 = vld [vmem:[%s1112 + $0x118] sm:$0xff]
        %v1149 = vld [vmem:[%s1112 + $0x120] sm:$0xff]
        %v1150 = vld [vmem:[%s1112 + $0x128] sm:$0xff]
        %v1151 = vld [vmem:[%s1112 + $0x130] sm:$0xff]
        %v1152 = vld [vmem:[%s1112 + $0x138] sm:$0xff]
        %v1153 = vld [vmem:[%s1112 + $0x140] sm:$0xff]
        %v1154 = vld [vmem:[%s1112 + $0x148] sm:$0xff]
        %v1155 = vld [vmem:[%s1112 + $0x150] sm:$0xff]
        %v1156 = vld [vmem:[%s1112 + $0x158] sm:$0xff]
        %v1157 = vld [vmem:[%s1112 + $0x160] sm:$0xff]
        %v1158 = vld [vmem:[%s1112 + $0x168] sm:$0xff]
        %v1159 = vld [vmem:[%s1112 + $0x170] sm:$0xff]
        %v1160 = vld [vmem:[%s1112 + $0x178] sm:$0xff]
        %s1161 = scalar_lea.vmem %s424, 2
        %v1162 = vld [vmem:[%s1161] sm:$0x3]
        %v1164 = vlaneseq
        %v1165 = vshrl.u32 %v1164, 7
        %v1166 = vsub.s32 0, %v1165
        %v1167 = vrot.slane %v1162, %v1166
        %v1168 = vlaneseq
        %v1169 = vshrl.u32 %v1168, 7
        %v1170 = vsub.s32 1, %v1169
        %v1171 = vrot.slane %v1162, %v1170
        %v1222 = vunpack.c.l.b16 %v1113
        %v1223 = vunpack.c.h.b16 %v1113
        %v1224 = vunpack.c.l.b16 %v1114
        %v1225 = vunpack.c.h.b16 %v1114
        %v1226 = vunpack.c.l.b16 %v1115
        %v1227 = vunpack.c.h.b16 %v1115
        %v1228 = vunpack.c.l.b16 %v1116
        %v1229 = vunpack.c.h.b16 %v1116
        %v1230 = vunpack.c.l.b16 %v1117
        %v1231 = vunpack.c.h.b16 %v1117
        %v1232 = vunpack.c.l.b16 %v1118
        %v1233 = vunpack.c.h.b16 %v1118
        %v1234 = vunpack.c.l.b16 %v1119
        %v1235 = vunpack.c.h.b16 %v1119
        %v1236 = vunpack.c.l.b16 %v1120
        %v1237 = vunpack.c.h.b16 %v1120
        %v1238 = vunpack.c.l.b16 %v1121
        %v1239 = vunpack.c.h.b16 %v1121
        %v1240 = vunpack.c.l.b16 %v1122
        %v1241 = vunpack.c.h.b16 %v1122
        %v1242 = vunpack.c.l.b16 %v1123
        %v1243 = vunpack.c.h.b16 %v1123
        %v1244 = vunpack.c.l.b16 %v1124
        %v1245 = vunpack.c.h.b16 %v1124
        %v1246 = vunpack.c.l.b16 %v1125
        %v1247 = vunpack.c.h.b16 %v1125
        %v1248 = vunpack.c.l.b16 %v1126
        %v1249 = vunpack.c.h.b16 %v1126
        %v1250 = vunpack.c.l.b16 %v1127
        %v1251 = vunpack.c.h.b16 %v1127
        %v1252 = vunpack.c.l.b16 %v1128
        %v1253 = vunpack.c.h.b16 %v1128
        %v1254 = vunpack.c.l.b16 %v1129
        %v1255 = vunpack.c.h.b16 %v1129
        %v1256 = vunpack.c.l.b16 %v1130
        %v1257 = vunpack.c.h.b16 %v1130
        %v1258 = vunpack.c.l.b16 %v1131
        %v1259 = vunpack.c.h.b16 %v1131
        %v1260 = vunpack.c.l.b16 %v1132
        %v1261 = vunpack.c.h.b16 %v1132
        %v1262 = vunpack.c.l.b16 %v1133
        %v1263 = vunpack.c.h.b16 %v1133
        %v1264 = vunpack.c.l.b16 %v1134
        %v1265 = vunpack.c.h.b16 %v1134
        %v1266 = vunpack.c.l.b16 %v1135
        %v1267 = vunpack.c.h.b16 %v1135
        %v1268 = vunpack.c.l.b16 %v1136
        %v1269 = vunpack.c.h.b16 %v1136
        %v1270 = vunpack.c.l.b16 %v1137
        %v1271 = vunpack.c.h.b16 %v1137
        %v1272 = vunpack.c.l.b16 %v1138
        %v1273 = vunpack.c.h.b16 %v1138
        %v1274 = vunpack.c.l.b16 %v1139
        %v1275 = vunpack.c.h.b16 %v1139
        %v1276 = vunpack.c.l.b16 %v1140
        %v1277 = vunpack.c.h.b16 %v1140
        %v1278 = vunpack.c.l.b16 %v1141
        %v1279 = vunpack.c.h.b16 %v1141
        %v1280 = vunpack.c.l.b16 %v1142
        %v1281 = vunpack.c.h.b16 %v1142
        %v1282 = vunpack.c.l.b16 %v1143
        %v1283 = vunpack.c.h.b16 %v1143
        %v1284 = vunpack.c.l.b16 %v1144
        %v1285 = vunpack.c.h.b16 %v1144
        %v1286 = vunpack.c.l.b16 %v1145
        %v1287 = vunpack.c.h.b16 %v1145
        %v1288 = vunpack.c.l.b16 %v1146
        %v1289 = vunpack.c.h.b16 %v1146
        %v1290 = vunpack.c.l.b16 %v1147
        %v1291 = vunpack.c.h.b16 %v1147
        %v1292 = vunpack.c.l.b16 %v1148
        %v1293 = vunpack.c.h.b16 %v1148
        %v1294 = vunpack.c.l.b16 %v1149
        %v1295 = vunpack.c.h.b16 %v1149
        %v1296 = vunpack.c.l.b16 %v1150
        %v1297 = vunpack.c.h.b16 %v1150
        %v1298 = vunpack.c.l.b16 %v1151
        %v1299 = vunpack.c.h.b16 %v1151
        %v1300 = vunpack.c.l.b16 %v1152
        %v1301 = vunpack.c.h.b16 %v1152
        %v1302 = vunpack.c.l.b16 %v1153
        %v1303 = vunpack.c.h.b16 %v1153
        %v1304 = vunpack.c.l.b16 %v1154
        %v1305 = vunpack.c.h.b16 %v1154
        %v1306 = vunpack.c.l.b16 %v1155
        %v1307 = vunpack.c.h.b16 %v1155
        %v1308 = vunpack.c.l.b16 %v1156
        %v1309 = vunpack.c.h.b16 %v1156
        %v1310 = vunpack.c.l.b16 %v1157
        %v1311 = vunpack.c.h.b16 %v1157
        %v1312 = vunpack.c.l.b16 %v1158
        %v1313 = vunpack.c.h.b16 %v1158
        %v1314 = vunpack.c.l.b16 %v1159
        %v1315 = vunpack.c.h.b16 %v1159
        %v1316 = vunpack.c.l.b16 %v1160
        %v1317 = vunpack.c.h.b16 %v1160
        %v1318 = vpack.c.b16 %v1224, %v1222
        %v1319 = vpack.c.b16 %v1225, %v1223
        %v1320 = vpack.c.b16 %v1228, %v1226
        %v1321 = vpack.c.b16 %v1229, %v1227
        %v1322 = vpack.c.b16 %v1232, %v1230
        %v1323 = vpack.c.b16 %v1233, %v1231
        %v1324 = vpack.c.b16 %v1236, %v1234
        %v1325 = vpack.c.b16 %v1237, %v1235
        %v1326 = vpack.c.b16 %v1240, %v1238
        %v1327 = vpack.c.b16 %v1241, %v1239
        %v1328 = vpack.c.b16 %v1244, %v1242
        %v1329 = vpack.c.b16 %v1245, %v1243
        %v1330 = vpack.c.b16 %v1248, %v1246
        %v1331 = vpack.c.b16 %v1249, %v1247
        %v1332 = vpack.c.b16 %v1252, %v1250
        %v1333 = vpack.c.b16 %v1253, %v1251
        %v1334 = vpack.c.b16 %v1256, %v1254
        %v1335 = vpack.c.b16 %v1257, %v1255
        %v1336 = vpack.c.b16 %v1260, %v1258
        %v1337 = vpack.c.b16 %v1261, %v1259
        %v1338 = vpack.c.b16 %v1264, %v1262
        %v1339 = vpack.c.b16 %v1265, %v1263
        %v1340 = vpack.c.b16 %v1268, %v1266
        %v1341 = vpack.c.b16 %v1269, %v1267
        %v1342 = vpack.c.b16 %v1272, %v1270
        %v1343 = vpack.c.b16 %v1273, %v1271
        %v1344 = vpack.c.b16 %v1276, %v1274
        %v1345 = vpack.c.b16 %v1277, %v1275
        %v1346 = vpack.c.b16 %v1280, %v1278
        %v1347 = vpack.c.b16 %v1281, %v1279
        %v1348 = vpack.c.b16 %v1284, %v1282
        %v1349 = vpack.c.b16 %v1285, %v1283
        %v1350 = vpack.c.b16 %v1288, %v1286
        %v1351 = vpack.c.b16 %v1289, %v1287
        %v1352 = vpack.c.b16 %v1292, %v1290
        %v1353 = vpack.c.b16 %v1293, %v1291
        %v1354 = vpack.c.b16 %v1296, %v1294
        %v1355 = vpack.c.b16 %v1297, %v1295
        %v1356 = vpack.c.b16 %v1300, %v1298
        %v1357 = vpack.c.b16 %v1301, %v1299
        %v1358 = vpack.c.b16 %v1304, %v1302
        %v1359 = vpack.c.b16 %v1305, %v1303
        %v1360 = vpack.c.b16 %v1308, %v1306
        %v1361 = vpack.c.b16 %v1309, %v1307
        %v1362 = vpack.c.b16 %v1312, %v1310
        %v1363 = vpack.c.b16 %v1313, %v1311
        %v1364 = vpack.c.b16 %v1316, %v1314
        %v1365 = vpack.c.b16 %v1317, %v1315
        %1414 = vmatprep.subr.bf16.mxu0 %v1319
        %1415 = vmatpush1.bf16.msra.mxu0 %v1318
        %1416 = vmatprep.subr.bf16.mxu0 %v1321
        %1417 = vmatpush1.bf16.msra.mxu0 %v1320
        %1418 = vmatprep.subr.bf16.mxu0 %v1323
        %1419 = vmatpush1.bf16.msra.mxu0 %v1322
        %1420 = vmatprep.subr.bf16.mxu0 %v1325
        %1421 = vmatpush1.bf16.msra.mxu0 %v1324
        %1422 = vmatprep.subr.bf16.mxu0 %v1327
        %1423 = vmatpush1.bf16.msra.mxu0 %v1326
        %1424 = vmatprep.subr.bf16.mxu0 %v1329
        %1425 = vmatpush1.bf16.msra.mxu0 %v1328
        %1426 = vmatprep.subr.bf16.mxu0 %v1331
        %1427 = vmatpush1.bf16.msra.mxu0 %v1330
        %1428 = vmatprep.subr.bf16.mxu0 %v1333
        %1429 = vmatpush1.bf16.msra.mxu0 %v1332
        %1430 = vmatprep.subr.bf16.mxu0 %v1335
        %1431 = vmatpush1.bf16.msra.mxu0 %v1334
        %1432 = vmatprep.subr.bf16.mxu0 %v1337
        %1433 = vmatpush1.bf16.msra.mxu0 %v1336
        %1434 = vmatprep.subr.bf16.mxu0 %v1339
        %1435 = vmatpush1.bf16.msra.mxu0 %v1338
        %1436 = vmatprep.subr.bf16.mxu0 %v1341
        %1437 = vmatpush1.bf16.msra.mxu0 %v1340
        %1438 = vmatprep.subr.bf16.mxu0 %v1343
        %1439 = vmatpush1.bf16.msra.mxu0 %v1342
        %1440 = vmatprep.subr.bf16.mxu0 %v1345
        %1441 = vmatpush1.bf16.msra.mxu0 %v1344
        %1442 = vmatprep.subr.bf16.mxu0 %v1347
        %1443 = vmatpush1.bf16.msra.mxu0 %v1346
        %1444 = vmatprep.subr.bf16.mxu0 %v1349
        %1445 = vmatpush1.bf16.msra.mxu0 %v1348
        %1446 = vmatprep.mubr.bf16.mxu0 %v1108
        %1447 = vmatmul.mubr.bf16.gmra.mrb[0].mxu0 %v1107
        %v1448 = vpop.f32.mrb[0].mxu0
        %v1449 = vadd.f32 %v1167, %v1448
        %v1450 = vpop.f32.mrb[0].mxu0
        %v1451 = vadd.f32 %v1171, %v1450
        %v1452 = vpop.f32.mrb[0].mxu0
        %v1453 = vadd.f32 %v1167, %v1452
        %v1454 = vpop.f32.mrb[0].mxu0
        %v1455 = vadd.f32 %v1171, %v1454
        %1456 = vdwg.mxu0
        %1457 = vmatprep.subr.bf16.mxu0 %v1351
        %1458 = vmatpush1.bf16.msra.mxu0 %v1350
        %1459 = vmatprep.subr.bf16.mxu0 %v1353
        %1460 = vmatpush1.bf16.msra.mxu0 %v1352
        %1461 = vmatprep.subr.bf16.mxu0 %v1355
        %1462 = vmatpush1.bf16.msra.mxu0 %v1354
        %1463 = vmatprep.subr.bf16.mxu0 %v1357
        %1464 = vmatpush1.bf16.msra.mxu0 %v1356
        %1465 = vmatprep.subr.bf16.mxu0 %v1359
        %1466 = vmatpush1.bf16.msra.mxu0 %v1358
        %1467 = vmatprep.subr.bf16.mxu0 %v1361
        %1468 = vmatpush1.bf16.msra.mxu0 %v1360
        %1469 = vmatprep.subr.bf16.mxu0 %v1363
        %1470 = vmatpush1.bf16.msra.mxu0 %v1362
        %1471 = vmatprep.subr.bf16.mxu0 %v1365
        %1472 = vmatpush1.bf16.msra.mxu0 %v1364
        %1473 = vmatprep.subr.bf16.mxu0 0
        %1474 = vmatpush1.bf16.msra.mxu0 0
        %1475 = vmatprep.subr.bf16.mxu0 0
        %1476 = vmatpush1.bf16.msra.mxu0 0
        %1477 = vmatprep.subr.bf16.mxu0 0
        %1478 = vmatpush1.bf16.msra.mxu0 0
        %1479 = vmatprep.subr.bf16.mxu0 0
        %1480 = vmatpush1.bf16.msra.mxu0 0
        %1481 = vmatprep.subr.bf16.mxu0 0
        %1482 = vmatpush1.bf16.msra.mxu0 0
        %1483 = vmatprep.subr.bf16.mxu0 0
        %1484 = vmatpush1.bf16.msra.mxu0 0
        %1485 = vmatprep.subr.bf16.mxu0 0
        %1486 = vmatpush1.bf16.msra.mxu0 0
        %1487 = vmatprep.subr.bf16.mxu0 0
        %1488 = vmatpush1.bf16.msra.mxu0 0
        %1489 = vmatprep.mubr.bf16.mxu0 0
        %1490 = vmatmul.mubr.bf16.gmra.mrb[0].mxu0 %v1111
        %v1491 = vpop.f32.mrb[0].mxu0
        %v1492 = vadd.f32 %v1449, %v1491
        %v1493 = vpop.f32.mrb[0].mxu0
        %v1494 = vadd.f32 %v1451, %v1493
        %v1495 = vpop.f32.mrb[0].mxu0
        %v1496 = vadd.f32 %v1453, %v1495
        %v1497 = vpop.f32.mrb[0].mxu0
        %v1498 = vadd.f32 %v1455, %v1497
        %1499 = vdwg.mxu0
        %v1500 = vtanh.pop %v1492
        %v1501 = vtanh.pop %v1496
        %v1502 = vxor.u32 %v1494, 2147483648
        %v1503 = vxor.u32 %v1498, 2147483648
        %v1504 = vmul.f32 %v1502, 1.442695
        %v1505 = vpow.pop %v1504
        %v1506 = vmul.f32 %v1503, 1.442695
        %v1507 = vpow.pop %v1506
        %v1508 = vadd.f32 %v1505, 1.0
        %v1509 = vadd.f32 %v1507, 1.0
        %v1510 = vrcp.pop %v1508
        %v1511 = vmul.f32 1.0, %v1510
        %v1512 = vrcp.pop %v1509
        %v1513 = vmul.f32 1.0, %v1512
        %v1514 = vmul.f32 %v1500, %v1511
        %v1515 = vmul.f32 %v1501, %v1513
        %v1516 = vpack.c.bf16 %v1515, %v1514
        %s1517 = scalar_lea.vmem [#allocation6], 128
        %v1518 = vld [vmem:[%s1517] sm:$0xff]
        %v1519 = vld [vmem:[%s1517 + $0x8] sm:$0xff]
        %v1520 = vld [vmem:[%s1517 + $0x10] sm:$0xff]
        %v1521 = vld [vmem:[%s1517 + $0x18] sm:$0xff]
        %v1522 = vld [vmem:[%s1517 + $0x20] sm:$0xff]
        %v1523 = vld [vmem:[%s1517 + $0x28] sm:$0xff]
        %v1524 = vld [vmem:[%s1517 + $0x30] sm:$0xff]
        %v1525 = vld [vmem:[%s1517 + $0x38] sm:$0xff]
        %v1526 = vld [vmem:[%s1517 + $0x40] sm:$0xff]
        %v1527 = vld [vmem:[%s1517 + $0x48] sm:$0xff]
        %v1528 = vld [vmem:[%s1517 + $0x50] sm:$0xff]
        %v1529 = vld [vmem:[%s1517 + $0x58] sm:$0xff]
        %v1530 = vld [vmem:[%s1517 + $0x60] sm:$0xff]
        %v1531 = vld [vmem:[%s1517 + $0x68] sm:$0xff]
        %v1532 = vld [vmem:[%s1517 + $0x70] sm:$0xff]
        %v1533 = vld [vmem:[%s1517 + $0x78] sm:$0xff]
        %s1534 = scalar_lea.vmem %s7, 2
        %v1535 = vld [vmem:[%s1534] sm:$0x3]
        %v1537 = vlaneseq
        %v1538 = vshrl.u32 %v1537, 7
        %v1539 = vsub.s32 0, %v1538
        %v1540 = vrot.slane %v1535, %v1539
        %v1541 = vlaneseq
        %v1542 = vshrl.u32 %v1541, 7
        %v1543 = vsub.s32 1, %v1542
        %v1544 = vrot.slane %v1535, %v1543
        %v1563 = vunpack.c.l.b16 %v1518
        %v1564 = vunpack.c.h.b16 %v1518
        %v1565 = vunpack.c.l.b16 %v1519
        %v1566 = vunpack.c.h.b16 %v1519
        %v1567 = vunpack.c.l.b16 %v1520
        %v1568 = vunpack.c.h.b16 %v1520
        %v1569 = vunpack.c.l.b16 %v1521
        %v1570 = vunpack.c.h.b16 %v1521
        %v1571 = vunpack.c.l.b16 %v1522
        %v1572 = vunpack.c.h.b16 %v1522
        %v1573 = vunpack.c.l.b16 %v1523
        %v1574 = vunpack.c.h.b16 %v1523
        %v1575 = vunpack.c.l.b16 %v1524
        %v1576 = vunpack.c.h.b16 %v1524
        %v1577 = vunpack.c.l.b16 %v1525
        %v1578 = vunpack.c.h.b16 %v1525
        %v1579 = vunpack.c.l.b16 %v1526
        %v1580 = vunpack.c.h.b16 %v1526
        %v1581 = vunpack.c.l.b16 %v1527
        %v1582 = vunpack.c.h.b16 %v1527
        %v1583 = vunpack.c.l.b16 %v1528
        %v1584 = vunpack.c.h.b16 %v1528
        %v1585 = vunpack.c.l.b16 %v1529
        %v1586 = vunpack.c.h.b16 %v1529
        %v1587 = vunpack.c.l.b16 %v1530
        %v1588 = vunpack.c.h.b16 %v1530
        %v1589 = vunpack.c.l.b16 %v1531
        %v1590 = vunpack.c.h.b16 %v1531
        %v1591 = vunpack.c.l.b16 %v1532
        %v1592 = vunpack.c.h.b16 %v1532
        %v1593 = vunpack.c.l.b16 %v1533
        %v1594 = vunpack.c.h.b16 %v1533
        %v1595 = vpack.c.b16 %v1565, %v1563
        %v1596 = vpack.c.b16 %v1566, %v1564
        %v1597 = vpack.c.b16 %v1569, %v1567
        %v1598 = vpack.c.b16 %v1570, %v1568
        %v1599 = vpack.c.b16 %v1573, %v1571
        %v1600 = vpack.c.b16 %v1574, %v1572
        %v1601 = vpack.c.b16 %v1577, %v1575
        %v1602 = vpack.c.b16 %v1578, %v1576
        %v1603 = vpack.c.b16 %v1581, %v1579
        %v1604 = vpack.c.b16 %v1582, %v1580
        %v1605 = vpack.c.b16 %v1585, %v1583
        %v1606 = vpack.c.b16 %v1586, %v1584
        %v1607 = vpack.c.b16 %v1589, %v1587
        %v1608 = vpack.c.b16 %v1590, %v1588
        %v1609 = vpack.c.b16 %v1593, %v1591
        %v1610 = vpack.c.b16 %v1594, %v1592
        %1627 = vmatprep.subr.bf16.mxu0 %v1596
        %1628 = vmatpush1.bf16.msra.mxu0 %v1595
        %1629 = vmatprep.subr.bf16.mxu0 %v1598
        %1630 = vmatpush1.bf16.msra.mxu0 %v1597
        %1631 = vmatprep.subr.bf16.mxu0 %v1600
        %1632 = vmatpush1.bf16.msra.mxu0 %v1599
        %1633 = vmatprep.subr.bf16.mxu0 %v1602
        %1634 = vmatpush1.bf16.msra.mxu0 %v1601
        %1635 = vmatprep.subr.bf16.mxu0 %v1604
        %1636 = vmatpush1.bf16.msra.mxu0 %v1603
        %1637 = vmatprep.subr.bf16.mxu0 %v1606
        %1638 = vmatpush1.bf16.msra.mxu0 %v1605
        %1639 = vmatprep.subr.bf16.mxu0 %v1608
        %1640 = vmatpush1.bf16.msra.mxu0 %v1607
        %1641 = vmatprep.subr.bf16.mxu0 %v1610
        %1642 = vmatpush1.bf16.msra.mxu0 %v1609
        %1643 = vmatprep.subr.bf16.mxu0 0
        %1644 = vmatpush1.bf16.msra.mxu0 0
        %1645 = vmatprep.subr.bf16.mxu0 0
        %1646 = vmatpush1.bf16.msra.mxu0 0
        %1647 = vmatprep.subr.bf16.mxu0 0
        %1648 = vmatpush1.bf16.msra.mxu0 0
        %1649 = vmatprep.subr.bf16.mxu0 0
        %1650 = vmatpush1.bf16.msra.mxu0 0
        %1651 = vmatprep.subr.bf16.mxu0 0
        %1652 = vmatpush1.bf16.msra.mxu0 0
        %1653 = vmatprep.subr.bf16.mxu0 0
        %1654 = vmatpush1.bf16.msra.mxu0 0
        %1655 = vmatprep.subr.bf16.mxu0 0
        %1656 = vmatpush1.bf16.msra.mxu0 0
        %1657 = vmatprep.subr.bf16.mxu0 0
        %1658 = vmatpush1.bf16.msra.mxu0 0
        %1659 = vmatprep.mubr.bf16.mxu0 0
        %1660 = vmatmul.mubr.bf16.gmra.mrb[0].mxu0 %v1516
        %v1661 = vpop.f32.mrb[0].mxu0
        %v1662 = vadd.f32 %v1540, %v1661
        %v1663 = vpop.f32.mrb[0].mxu0
        %v1664 = vadd.f32 %v1544, %v1663
        %v1665 = vpop.f32.mrb[0].mxu0
        %v1666 = vadd.f32 %v1540, %v1665
        %v1667 = vpop.f32.mrb[0].mxu0
        %v1668 = vadd.f32 %v1544, %v1667
        %1669 = vdwg.mxu0
        %v1670 = vadd.f32 %v1103, %v1662
        %v1671 = vadd.f32 %v1104, %v1666
        %v1672 = vmul.f32 %v1670, %v509
        %v1673 = vmul.f32 %v1671, %v514
        %1674 = vst [vmem:[#allocation2 + $0x8] sm:$0xff] %v1672
        %1675 = vst [vmem:[#allocation2 + $0x10] sm:$0xff] %v1673
        %v1676 = vadd.f32 %v1091, %v1664
        %v1677 = vadd.f32 %v1095, %v1668
        %v1678 = vld [vmem:[#allocation2 + $0x4] sm:$0xff]
        %v1679 = vld [vmem:[#allocation2 + $0xc] sm:$0xff]
        %v1680 = vpack.c.bf16 %v1679, %v1678
        %v1681 = vld [vmem:[#allocation2 + $0x8] sm:$0xff]
        %v1682 = vld [vmem:[#allocation2 + $0x10] sm:$0xff]
        %v1683 = vpack.c.bf16 %v1682, %v1681
        %v1684 = vld [vmem:[#allocation2 + $0x14] sm:$0xff]
        %v1685 = vpack.c.bf16 %v1684, %v1679
        %s1686 = scalar_lea.vmem [#allocation3], 768
        %v1687 = vld [vmem:[%s1686] sm:$0xff]
        %v1688 = vld [vmem:[%s1686 + $0x8] sm:$0xff]
        %v1689 = vld [vmem:[%s1686 + $0x10] sm:$0xff]
        %v1690 = vld [vmem:[%s1686 + $0x18] sm:$0xff]
        %v1691 = vld [vmem:[%s1686 + $0x20] sm:$0xff]
        %v1692 = vld [vmem:[%s1686 + $0x28] sm:$0xff]
        %v1693 = vld [vmem:[%s1686 + $0x30] sm:$0xff]
        %v1694 = vld [vmem:[%s1686 + $0x38] sm:$0xff]
        %v1695 = vld [vmem:[%s1686 + $0x40] sm:$0xff]
        %v1696 = vld [vmem:[%s1686 + $0x48] sm:$0xff]
        %v1697 = vld [vmem:[%s1686 + $0x50] sm:$0xff]
        %v1698 = vld [vmem:[%s1686 + $0x58] sm:$0xff]
        %v1699 = vld [vmem:[%s1686 + $0x60] sm:$0xff]
        %v1700 = vld [vmem:[%s1686 + $0x68] sm:$0xff]
        %v1701 = vld [vmem:[%s1686 + $0x70] sm:$0xff]
        %v1702 = vld [vmem:[%s1686 + $0x78] sm:$0xff]
        %v1703 = vld [vmem:[%s1686 + $0x80] sm:$0xff]
        %v1704 = vld [vmem:[%s1686 + $0x88] sm:$0xff]
        %v1705 = vld [vmem:[%s1686 + $0x90] sm:$0xff]
        %v1706 = vld [vmem:[%s1686 + $0x98] sm:$0xff]
        %v1707 = vld [vmem:[%s1686 + $0xa0] sm:$0xff]
        %v1708 = vld [vmem:[%s1686 + $0xa8] sm:$0xff]
        %v1709 = vld [vmem:[%s1686 + $0xb0] sm:$0xff]
        %v1710 = vld [vmem:[%s1686 + $0xb8] sm:$0xff]
        %v1711 = vld [vmem:[%s1686 + $0xc0] sm:$0xff]
        %v1712 = vld [vmem:[%s1686 + $0xc8] sm:$0xff]
        %v1713 = vld [vmem:[%s1686 + $0xd0] sm:$0xff]
        %v1714 = vld [vmem:[%s1686 + $0xd8] sm:$0xff]
        %v1715 = vld [vmem:[%s1686 + $0xe0] sm:$0xff]
        %v1716 = vld [vmem:[%s1686 + $0xe8] sm:$0xff]
        %v1717 = vld [vmem:[%s1686 + $0xf0] sm:$0xff]
        %v1718 = vld [vmem:[%s1686 + $0xf8] sm:$0xff]
        %v1719 = vld [vmem:[%s1686 + $0x100] sm:$0xff]
        %v1720 = vld [vmem:[%s1686 + $0x108] sm:$0xff]
        %v1721 = vld [vmem:[%s1686 + $0x110] sm:$0xff]
        %v1722 = vld [vmem:[%s1686 + $0x118] sm:$0xff]
        %v1723 = vld [vmem:[%s1686 + $0x120] sm:$0xff]
        %v1724 = vld [vmem:[%s1686 + $0x128] sm:$0xff]
        %v1725 = vld [vmem:[%s1686 + $0x130] sm:$0xff]
        %v1726 = vld [vmem:[%s1686 + $0x138] sm:$0xff]
        %v1727 = vld [vmem:[%s1686 + $0x140] sm:$0xff]
        %v1728 = vld [vmem:[%s1686 + $0x148] sm:$0xff]
        %v1729 = vld [vmem:[%s1686 + $0x150] sm:$0xff]
        %v1730 = vld [vmem:[%s1686 + $0x158] sm:$0xff]
        %v1731 = vld [vmem:[%s1686 + $0x160] sm:$0xff]
        %v1732 = vld [vmem:[%s1686 + $0x168] sm:$0xff]
        %v1733 = vld [vmem:[%s1686 + $0x170] sm:$0xff]
        %v1734 = vld [vmem:[%s1686 + $0x178] sm:$0xff]
        %s1735 = scalar_lea.vmem %s424, 4
        %v1736 = vld [vmem:[%s1735] sm:$0x3]
        %v1738 = vlaneseq
        %v1739 = vshrl.u32 %v1738, 7
        %v1740 = vsub.s32 0, %v1739
        %v1741 = vrot.slane %v1736, %v1740
        %v1742 = vlaneseq
        %v1743 = vshrl.u32 %v1742, 7
        %v1744 = vsub.s32 1, %v1743
        %v1745 = vrot.slane %v1736, %v1744
        %v1796 = vunpack.c.l.b16 %v1687
        %v1797 = vunpack.c.h.b16 %v1687
        %v1798 = vunpack.c.l.b16 %v1688
        %v1799 = vunpack.c.h.b16 %v1688
        %v1800 = vunpack.c.l.b16 %v1689
        %v1801 = vunpack.c.h.b16 %v1689
        %v1802 = vunpack.c.l.b16 %v1690
        %v1803 = vunpack.c.h.b16 %v1690
        %v1804 = vunpack.c.l.b16 %v1691
        %v1805 = vunpack.c.h.b16 %v1691
        %v1806 = vunpack.c.l.b16 %v1692
        %v1807 = vunpack.c.h.b16 %v1692
        %v1808 = vunpack.c.l.b16 %v1693
        %v1809 = vunpack.c.h.b16 %v1693
        %v1810 = vunpack.c.l.b16 %v1694
        %v1811 = vunpack.c.h.b16 %v1694
        %v1812 = vunpack.c.l.b16 %v1695
        %v1813 = vunpack.c.h.b16 %v1695
        %v1814 = vunpack.c.l.b16 %v1696
        %v1815 = vunpack.c.h.b16 %v1696
        %v1816 = vunpack.c.l.b16 %v1697
        %v1817 = vunpack.c.h.b16 %v1697
        %v1818 = vunpack.c.l.b16 %v1698
        %v1819 = vunpack.c.h.b16 %v1698
        %v1820 = vunpack.c.l.b16 %v1699
        %v1821 = vunpack.c.h.b16 %v1699
        %v1822 = vunpack.c.l.b16 %v1700
        %v1823 = vunpack.c.h.b16 %v1700
        %v1824 = vunpack.c.l.b16 %v1701
        %v1825 = vunpack.c.h.b16 %v1701
        %v1826 = vunpack.c.l.b16 %v1702
        %v1827 = vunpack.c.h.b16 %v1702
        %v1828 = vunpack.c.l.b16 %v1703
        %v1829 = vunpack.c.h.b16 %v1703
        %v1830 = vunpack.c.l.b16 %v1704
        %v1831 = vunpack.c.h.b16 %v1704
        %v1832 = vunpack.c.l.b16 %v1705
        %v1833 = vunpack.c.h.b16 %v1705
        %v1834 = vunpack.c.l.b16 %v1706
        %v1835 = vunpack.c.h.b16 %v1706
        %v1836 = vunpack.c.l.b16 %v1707
        %v1837 = vunpack.c.h.b16 %v1707
        %v1838 = vunpack.c.l.b16 %v1708
        %v1839 = vunpack.c.h.b16 %v1708
        %v1840 = vunpack.c.l.b16 %v1709
        %v1841 = vunpack.c.h.b16 %v1709
        %v1842 = vunpack.c.l.b16 %v1710
        %v1843 = vunpack.c.h.b16 %v1710
        %v1844 = vunpack.c.l.b16 %v1711
        %v1845 = vunpack.c.h.b16 %v1711
        %v1846 = vunpack.c.l.b16 %v1712
        %v1847 = vunpack.c.h.b16 %v1712
        %v1848 = vunpack.c.l.b16 %v1713
        %v1849 = vunpack.c.h.b16 %v1713
        %v1850 = vunpack.c.l.b16 %v1714
        %v1851 = vunpack.c.h.b16 %v1714
        %v1852 = vunpack.c.l.b16 %v1715
        %v1853 = vunpack.c.h.b16 %v1715
        %v1854 = vunpack.c.l.b16 %v1716
        %v1855 = vunpack.c.h.b16 %v1716
        %v1856 = vunpack.c.l.b16 %v1717
        %v1857 = vunpack.c.h.b16 %v1717
        %v1858 = vunpack.c.l.b16 %v1718
        %v1859 = vunpack.c.h.b16 %v1718
        %v1860 = vunpack.c.l.b16 %v1719
        %v1861 = vunpack.c.h.b16 %v1719
        %v1862 = vunpack.c.l.b16 %v1720
        %v1863 = vunpack.c.h.b16 %v1720
        %v1864 = vunpack.c.l.b16 %v1721
        %v1865 = vunpack.c.h.b16 %v1721
        %v1866 = vunpack.c.l.b16 %v1722
        %v1867 = vunpack.c.h.b16 %v1722
        %v1868 = vunpack.c.l.b16 %v1723
        %v1869 = vunpack.c.h.b16 %v1723
        %v1870 = vunpack.c.l.b16 %v1724
        %v1871 = vunpack.c.h.b16 %v1724
        %v1872 = vunpack.c.l.b16 %v1725
        %v1873 = vunpack.c.h.b16 %v1725
        %v1874 = vunpack.c.l.b16 %v1726
        %v1875 = vunpack.c.h.b16 %v1726
        %v1876 = vunpack.c.l.b16 %v1727
        %v1877 = vunpack.c.h.b16 %v1727
        %v1878 = vunpack.c.l.b16 %v1728
        %v1879 = vunpack.c.h.b16 %v1728
        %v1880 = vunpack.c.l.b16 %v1729
        %v1881 = vunpack.c.h.b16 %v1729
        %v1882 = vunpack.c.l.b16 %v1730
        %v1883 = vunpack.c.h.b16 %v1730
        %v1884 = vunpack.c.l.b16 %v1731
        %v1885 = vunpack.c.h.b16 %v1731
        %v1886 = vunpack.c.l.b16 %v1732
        %v1887 = vunpack.c.h.b16 %v1732
        %v1888 = vunpack.c.l.b16 %v1733
        %v1889 = vunpack.c.h.b16 %v1733
        %v1890 = vunpack.c.l.b16 %v1734
        %v1891 = vunpack.c.h.b16 %v1734
        %v1892 = vpack.c.b16 %v1798, %v1796
        %v1893 = vpack.c.b16 %v1799, %v1797
        %v1894 = vpack.c.b16 %v1802, %v1800
        %v1895 = vpack.c.b16 %v1803, %v1801
        %v1896 = vpack.c.b16 %v1806, %v1804
        %v1897 = vpack.c.b16 %v1807, %v1805
        %v1898 = vpack.c.b16 %v1810, %v1808
        %v1899 = vpack.c.b16 %v1811, %v1809
        %v1900 = vpack.c.b16 %v1814, %v1812
        %v1901 = vpack.c.b16 %v1815, %v1813
        %v1902 = vpack.c.b16 %v1818, %v1816
        %v1903 = vpack.c.b16 %v1819, %v1817
        %v1904 = vpack.c.b16 %v1822, %v1820
        %v1905 = vpack.c.b16 %v1823, %v1821
        %v1906 = vpack.c.b16 %v1826, %v1824
        %v1907 = vpack.c.b16 %v1827, %v1825
        %v1908 = vpack.c.b16 %v1830, %v1828
        %v1909 = vpack.c.b16 %v1831, %v1829
        %v1910 = vpack.c.b16 %v1834, %v1832
        %v1911 = vpack.c.b16 %v1835, %v1833
        %v1912 = vpack.c.b16 %v1838, %v1836
        %v1913 = vpack.c.b16 %v1839, %v1837
        %v1914 = vpack.c.b16 %v1842, %v1840
        %v1915 = vpack.c.b16 %v1843, %v1841
        %v1916 = vpack.c.b16 %v1846, %v1844
        %v1917 = vpack.c.b16 %v1847, %v1845
        %v1918 = vpack.c.b16 %v1850, %v1848
        %v1919 = vpack.c.b16 %v1851, %v1849
        %v1920 = vpack.c.b16 %v1854, %v1852
        %v1921 = vpack.c.b16 %v1855, %v1853
        %v1922 = vpack.c.b16 %v1858, %v1856
        %v1923 = vpack.c.b16 %v1859, %v1857
        %v1924 = vpack.c.b16 %v1862, %v1860
        %v1925 = vpack.c.b16 %v1863, %v1861
        %v1926 = vpack.c.b16 %v1866, %v1864
        %v1927 = vpack.c.b16 %v1867, %v1865
        %v1928 = vpack.c.b16 %v1870, %v1868
        %v1929 = vpack.c.b16 %v1871, %v1869
        %v1930 = vpack.c.b16 %v1874, %v1872
        %v1931 = vpack.c.b16 %v1875, %v1873
        %v1932 = vpack.c.b16 %v1878, %v1876
        %v1933 = vpack.c.b16 %v1879, %v1877
        %v1934 = vpack.c.b16 %v1882, %v1880
        %v1935 = vpack.c.b16 %v1883, %v1881
        %v1936 = vpack.c.b16 %v1886, %v1884
        %v1937 = vpack.c.b16 %v1887, %v1885
        %v1938 = vpack.c.b16 %v1890, %v1888
        %v1939 = vpack.c.b16 %v1891, %v1889
        %1988 = vmatprep.subr.bf16.mxu0 %v1893
        %1989 = vmatpush1.bf16.msra.mxu0 %v1892
        %1990 = vmatprep.subr.bf16.mxu0 %v1895
        %1991 = vmatpush1.bf16.msra.mxu0 %v1894
        %1992 = vmatprep.subr.bf16.mxu0 %v1897
        %1993 = vmatpush1.bf16.msra.mxu0 %v1896
        %1994 = vmatprep.subr.bf16.mxu0 %v1899
        %1995 = vmatpush1.bf16.msra.mxu0 %v1898
        %1996 = vmatprep.subr.bf16.mxu0 %v1901
        %1997 = vmatpush1.bf16.msra.mxu0 %v1900
        %1998 = vmatprep.subr.bf16.mxu0 %v1903
        %1999 = vmatpush1.bf16.msra.mxu0 %v1902
        %2000 = vmatprep.subr.bf16.mxu0 %v1905
        %2001 = vmatpush1.bf16.msra.mxu0 %v1904
        %2002 = vmatprep.subr.bf16.mxu0 %v1907
        %2003 = vmatpush1.bf16.msra.mxu0 %v1906
        %2004 = vmatprep.subr.bf16.mxu0 %v1909
        %2005 = vmatpush1.bf16.msra.mxu0 %v1908
        %2006 = vmatprep.subr.bf16.mxu0 %v1911
        %2007 = vmatpush1.bf16.msra.mxu0 %v1910
        %2008 = vmatprep.subr.bf16.mxu0 %v1913
        %2009 = vmatpush1.bf16.msra.mxu0 %v1912
        %2010 = vmatprep.subr.bf16.mxu0 %v1915
        %2011 = vmatpush1.bf16.msra.mxu0 %v1914
        %2012 = vmatprep.subr.bf16.mxu0 %v1917
        %2013 = vmatpush1.bf16.msra.mxu0 %v1916
        %2014 = vmatprep.subr.bf16.mxu0 %v1919
        %2015 = vmatpush1.bf16.msra.mxu0 %v1918
        %2016 = vmatprep.subr.bf16.mxu0 %v1921
        %2017 = vmatpush1.bf16.msra.mxu0 %v1920
        %2018 = vmatprep.subr.bf16.mxu0 %v1923
        %2019 = vmatpush1.bf16.msra.mxu0 %v1922
        %2020 = vmatprep.mubr.bf16.mxu0 %v1683
        %2021 = vmatmul.mubr.bf16.gmra.mrb[0].mxu0 %v1680
        %v2022 = vpop.f32.mrb[0].mxu0
        %v2023 = vadd.f32 %v1741, %v2022
        %v2024 = vpop.f32.mrb[0].mxu0
        %v2025 = vadd.f32 %v1745, %v2024
        %v2026 = vpop.f32.mrb[0].mxu0
        %v2027 = vadd.f32 %v1741, %v2026
        %v2028 = vpop.f32.mrb[0].mxu0
        %v2029 = vadd.f32 %v1745, %v2028
        %2030 = vdwg.mxu0
        %2031 = vmatprep.subr.bf16.mxu0 %v1925
        %2032 = vmatpush1.bf16.msra.mxu0 %v1924
        %2033 = vmatprep.subr.bf16.mxu0 %v1927
        %2034 = vmatpush1.bf16.msra.mxu0 %v1926
        %2035 = vmatprep.subr.bf16.mxu0 %v1929
        %2036 = vmatpush1.bf16.msra.mxu0 %v1928
        %2037 = vmatprep.subr.bf16.mxu0 %v1931
        %2038 = vmatpush1.bf16.msra.mxu0 %v1930
        %2039 = vmatprep.subr.bf16.mxu0 %v1933
        %2040 = vmatpush1.bf16.msra.mxu0 %v1932
        %2041 = vmatprep.subr.bf16.mxu0 %v1935
        %2042 = vmatpush1.bf16.msra.mxu0 %v1934
        %2043 = vmatprep.subr.bf16.mxu0 %v1937
        %2044 = vmatpush1.bf16.msra.mxu0 %v1936
        %2045 = vmatprep.subr.bf16.mxu0 %v1939
        %2046 = vmatpush1.bf16.msra.mxu0 %v1938
        %2047 = vmatprep.subr.bf16.mxu0 0
        %2048 = vmatpush1.bf16.msra.mxu0 0
        %2049 = vmatprep.subr.bf16.mxu0 0
        %2050 = vmatpush1.bf16.msra.mxu0 0
        %2051 = vmatprep.subr.bf16.mxu0 0
        %2052 = vmatpush1.bf16.msra.mxu0 0
        %2053 = vmatprep.subr.bf16.mxu0 0
        %2054 = vmatpush1.bf16.msra.mxu0 0
        %2055 = vmatprep.subr.bf16.mxu0 0
        %2056 = vmatpush1.bf16.msra.mxu0 0
        %2057 = vmatprep.subr.bf16.mxu0 0
        %2058 = vmatpush1.bf16.msra.mxu0 0
        %2059 = vmatprep.subr.bf16.mxu0 0
        %2060 = vmatpush1.bf16.msra.mxu0 0
        %2061 = vmatprep.subr.bf16.mxu0 0
        %2062 = vmatpush1.bf16.msra.mxu0 0
        %2063 = vmatprep.mubr.bf16.mxu0 0
        %2064 = vmatmul.mubr.bf16.gmra.mrb[0].mxu0 %v1685
        %v2065 = vpop.f32.mrb[0].mxu0
        %v2066 = vadd.f32 %v2023, %v2065
        %v2067 = vpop.f32.mrb[0].mxu0
        %v2068 = vadd.f32 %v2025, %v2067
        %v2069 = vpop.f32.mrb[0].mxu0
        %v2070 = vadd.f32 %v2027, %v2069
        %v2071 = vpop.f32.mrb[0].mxu0
        %v2072 = vadd.f32 %v2029, %v2071
        %2073 = vdwg.mxu0
        %v2074 = vtanh.pop %v2066
        %v2075 = vtanh.pop %v2070
        %v2076 = vxor.u32 %v2068, 2147483648
        %v2077 = vxor.u32 %v2072, 2147483648
        %v2078 = vmul.f32 %v2076, 1.442695
        %v2079 = vpow.pop %v2078
        %v2080 = vmul.f32 %v2077, 1.442695
        %v2081 = vpow.pop %v2080
        %v2082 = vadd.f32 %v2079, 1.0
        %v2083 = vadd.f32 %v2081, 1.0
        %v2084 = vrcp.pop %v2082
        %v2085 = vmul.f32 1.0, %v2084
        %v2086 = vrcp.pop %v2083
        %v2087 = vmul.f32 1.0, %v2086
        %v2088 = vmul.f32 %v2074, %v2085
        %v2089 = vmul.f32 %v2075, %v2087
        %v2090 = vpack.c.bf16 %v2089, %v2088
        %s2091 = scalar_lea.vmem [#allocation6], 256
        %v2092 = vld [vmem:[%s2091] sm:$0xff]
        %v2093 = vld [vmem:[%s2091 + $0x8] sm:$0xff]
        %v2094 = vld [vmem:[%s2091 + $0x10] sm:$0xff]
        %v2095 = vld [vmem:[%s2091 + $0x18] sm:$0xff]
        %v2096 = vld [vmem:[%s2091 + $0x20] sm:$0xff]
        %v2097 = vld [vmem:[%s2091 + $0x28] sm:$0xff]
        %v2098 = vld [vmem:[%s2091 + $0x30] sm:$0xff]
        %v2099 = vld [vmem:[%s2091 + $0x38] sm:$0xff]
        %v2100 = vld [vmem:[%s2091 + $0x40] sm:$0xff]
        %v2101 = vld [vmem:[%s2091 + $0x48] sm:$0xff]
        %v2102 = vld [vmem:[%s2091 + $0x50] sm:$0xff]
        %v2103 = vld [vmem:[%s2091 + $0x58] sm:$0xff]
        %v2104 = vld [vmem:[%s2091 + $0x60] sm:$0xff]
        %v2105 = vld [vmem:[%s2091 + $0x68] sm:$0xff]
        %v2106 = vld [vmem:[%s2091 + $0x70] sm:$0xff]
        %v2107 = vld [vmem:[%s2091 + $0x78] sm:$0xff]
        %s2108 = scalar_lea.vmem %s7, 4
        %v2109 = vld [vmem:[%s2108] sm:$0x3]
        %v2111 = vlaneseq
        %v2112 = vshrl.u32 %v2111, 7
        %v2113 = vsub.s32 0, %v2112
        %v2114 = vrot.slane %v2109, %v2113
        %v2132 = vunpack.c.l.b16 %v2092
        %v2133 = vunpack.c.h.b16 %v2092
        %v2134 = vunpack.c.l.b16 %v2093
        %v2135 = vunpack.c.h.b16 %v2093
        %v2136 = vunpack.c.l.b16 %v2094
        %v2137 = vunpack.c.h.b16 %v2094
        %v2138 = vunpack.c.l.b16 %v2095
        %v2139 = vunpack.c.h.b16 %v2095
        %v2140 = vunpack.c.l.b16 %v2096
        %v2141 = vunpack.c.h.b16 %v2096
        %v2142 = vunpack.c.l.b16 %v2097
        %v2143 = vunpack.c.h.b16 %v2097
        %v2144 = vunpack.c.l.b16 %v2098
        %v2145 = vunpack.c.h.b16 %v2098
        %v2146 = vunpack.c.l.b16 %v2099
        %v2147 = vunpack.c.h.b16 %v2099
        %v2148 = vunpack.c.l.b16 %v2100
        %v2149 = vunpack.c.h.b16 %v2100
        %v2150 = vunpack.c.l.b16 %v2101
        %v2151 = vunpack.c.h.b16 %v2101
        %v2152 = vunpack.c.l.b16 %v2102
        %v2153 = vunpack.c.h.b16 %v2102
        %v2154 = vunpack.c.l.b16 %v2103
        %v2155 = vunpack.c.h.b16 %v2103
        %v2156 = vunpack.c.l.b16 %v2104
        %v2157 = vunpack.c.h.b16 %v2104
        %v2158 = vunpack.c.l.b16 %v2105
        %v2159 = vunpack.c.h.b16 %v2105
        %v2160 = vunpack.c.l.b16 %v2106
        %v2161 = vunpack.c.h.b16 %v2106
        %v2162 = vunpack.c.l.b16 %v2107
        %v2163 = vunpack.c.h.b16 %v2107
        %v2164 = vpack.c.b16 %v2134, %v2132
        %v2165 = vpack.c.b16 %v2135, %v2133
        %v2166 = vpack.c.b16 %v2138, %v2136
        %v2167 = vpack.c.b16 %v2139, %v2137
        %v2168 = vpack.c.b16 %v2142, %v2140
        %v2169 = vpack.c.b16 %v2143, %v2141
        %v2170 = vpack.c.b16 %v2146, %v2144
        %v2171 = vpack.c.b16 %v2147, %v2145
        %v2172 = vpack.c.b16 %v2150, %v2148
        %v2173 = vpack.c.b16 %v2151, %v2149
        %v2174 = vpack.c.b16 %v2154, %v2152
        %v2175 = vpack.c.b16 %v2155, %v2153
        %v2176 = vpack.c.b16 %v2158, %v2156
        %v2177 = vpack.c.b16 %v2159, %v2157
        %v2178 = vpack.c.b16 %v2162, %v2160
        %v2179 = vpack.c.b16 %v2163, %v2161
        %2196 = vmatprep.subr.bf16.mxu0 %v2165
        %2197 = vmatpush1.bf16.msra.mxu0 %v2164
        %2198 = vmatprep.subr.bf16.mxu0 %v2167
        %2199 = vmatpush1.bf16.msra.mxu0 %v2166
        %2200 = vmatprep.subr.bf16.mxu0 %v2169
        %2201 = vmatpush1.bf16.msra.mxu0 %v2168
        %2202 = vmatprep.subr.bf16.mxu0 %v2171
        %2203 = vmatpush1.bf16.msra.mxu0 %v2170
        %2204 = vmatprep.subr.bf16.mxu0 %v2173
        %2205 = vmatpush1.bf16.msra.mxu0 %v2172
        %2206 = vmatprep.subr.bf16.mxu0 %v2175
        %2207 = vmatpush1.bf16.msra.mxu0 %v2174
        %2208 = vmatprep.subr.bf16.mxu0 %v2177
        %2209 = vmatpush1.bf16.msra.mxu0 %v2176
        %2210 = vmatprep.subr.bf16.mxu0 %v2179
        %2211 = vmatpush1.bf16.msra.mxu0 %v2178
        %2212 = vmatprep.subr.bf16.mxu0 0
        %2213 = vmatpush1.bf16.msra.mxu0 0
        %2214 = vmatprep.subr.bf16.mxu0 0
        %2215 = vmatpush1.bf16.msra.mxu0 0
        %2216 = vmatprep.subr.bf16.mxu0 0
        %2217 = vmatpush1.bf16.msra.mxu0 0
        %2218 = vmatprep.subr.bf16.mxu0 0
        %2219 = vmatpush1.bf16.msra.mxu0 0
        %2220 = vmatprep.subr.bf16.mxu0 0
        %2221 = vmatpush1.bf16.msra.mxu0 0
        %2222 = vmatprep.subr.bf16.mxu0 0
        %2223 = vmatpush1.bf16.msra.mxu0 0
        %2224 = vmatprep.subr.bf16.mxu0 0
        %2225 = vmatpush1.bf16.msra.mxu0 0
        %2226 = vmatprep.subr.bf16.mxu0 0
        %2227 = vmatpush1.bf16.msra.mxu0 0
        %2228 = vmatprep.mubr.bf16.mxu0 0
        %2229 = vmatmul.mubr.bf16.gmra.mrb[0].mxu0 %v2090
        %v2230 = vpop.f32.mrb[0].mxu0
        %v2231 = vadd.f32 %v2114, %v2230
        %v2232 = vpop.f32.mrb[0].mxu0
        %v2233 = vpop.f32.mrb[0].mxu0
        %v2234 = vadd.f32 %v2114, %v2233
        %v2235 = vpop.f32.mrb[0].mxu0
        %2236 = vdwg.mxu0
        %v2237 = vadd.f32 %v1676, %v2231
        %v2238 = vadd.f32 %v1677, %v2234
        %v2239 = vmul.f32 %v2237, %v509
        %v2240 = vmul.f32 %v2238, %v514
        %v2241 = vpack.c.bf16 %v2240, %v2239
        %v2242 = vld [vmem:[%s8] sm:$0xf]
        %v2243 = vld [vmem:[%s8 + $0x4] sm:$0xf]
        %v2244 = vld [vmem:[%s8 + $0x8] sm:$0xf]
        %v2245 = vld [vmem:[%s8 + $0xc] sm:$0xf]
        %v2246 = vld [vmem:[%s8 + $0x10] sm:$0xf]
        %v2247 = vld [vmem:[%s8 + $0x14] sm:$0xf]
        %v2248 = vld [vmem:[%s8 + $0x18] sm:$0xf]
        %v2249 = vld [vmem:[%s8 + $0x1c] sm:$0xf]
        %v2250 = vld [vmem:[%s8 + $0x20] sm:$0xf]
        %v2251 = vld [vmem:[%s8 + $0x24] sm:$0xf]
        %v2252 = vld [vmem:[%s8 + $0x28] sm:$0xf]
        %v2253 = vld [vmem:[%s8 + $0x2c] sm:$0xf]
        %v2254 = vld [vmem:[%s8 + $0x30] sm:$0xf]
        %v2255 = vld [vmem:[%s8 + $0x34] sm:$0xf]
        %v2256 = vld [vmem:[%s8 + $0x38] sm:$0xf]
        %v2257 = vld [vmem:[%s8 + $0x3c] sm:$0xf]
        %v2258 = vld [vmem:[%s9] sm:$0x1]
        %v2260 = vlaneseq
        %v2261 = vshrl.u32 %v2260, 7
        %v2262 = vsub.s32 0, %v2261
        %v2263 = vrot.slane %v2258, %v2262
        %v2281 = vunpack.c.l.b16 %v2242
        %v2282 = vunpack.c.l.b16 %v2243
        %v2283 = vunpack.c.l.b16 %v2244
        %v2284 = vunpack.c.l.b16 %v2245
        %v2285 = vunpack.c.l.b16 %v2246
        %v2286 = vunpack.c.l.b16 %v2247
        %v2287 = vunpack.c.l.b16 %v2248
        %v2288 = vunpack.c.l.b16 %v2249
        %v2289 = vunpack.c.l.b16 %v2250
        %v2290 = vunpack.c.l.b16 %v2251
        %v2291 = vunpack.c.l.b16 %v2252
        %v2292 = vunpack.c.l.b16 %v2253
        %v2293 = vunpack.c.l.b16 %v2254
        %v2294 = vunpack.c.l.b16 %v2255
        %v2295 = vunpack.c.l.b16 %v2256
        %v2296 = vunpack.c.l.b16 %v2257
        %v2297 = vpack.c.b16 %v2282, %v2281
        %v2298 = vpack.c.b16 %v2284, %v2283
        %v2299 = vpack.c.b16 %v2286, %v2285
        %v2300 = vpack.c.b16 %v2288, %v2287
        %v2301 = vpack.c.b16 %v2290, %v2289
        %v2302 = vpack.c.b16 %v2292, %v2291
        %v2303 = vpack.c.b16 %v2294, %v2293
        %v2304 = vpack.c.b16 %v2296, %v2295
        %2313 = vmatprep.subr.bf16.mxu0 0
        %2314 = vmatpush1.bf16.msra.mxu0 %v2297
        %2315 = vmatprep.subr.bf16.mxu0 0
        %2316 = vmatpush1.bf16.msra.mxu0 %v2298
        %2317 = vmatprep.subr.bf16.mxu0 0
        %2318 = vmatpush1.bf16.msra.mxu0 %v2299
        %2319 = vmatprep.subr.bf16.mxu0 0
        %2320 = vmatpush1.bf16.msra.mxu0 %v2300
        %2321 = vmatprep.subr.bf16.mxu0 0
        %2322 = vmatpush1.bf16.msra.mxu0 %v2301
        %2323 = vmatprep.subr.bf16.mxu0 0
        %2324 = vmatpush1.bf16.msra.mxu0 %v2302
        %2325 = vmatprep.subr.bf16.mxu0 0
        %2326 = vmatpush1.bf16.msra.mxu0 %v2303
        %2327 = vmatprep.subr.bf16.mxu0 0
        %2328 = vmatpush1.bf16.msra.mxu0 %v2304
        %2329 = vmatprep.subr.bf16.mxu0 0
        %2330 = vmatpush1.bf16.msra.mxu0 0
        %2331 = vmatprep.subr.bf16.mxu0 0
        %2332 = vmatpush1.bf16.msra.mxu0 0
        %2333 = vmatprep.subr.bf16.mxu0 0
        %2334 = vmatpush1.bf16.msra.mxu0 0
        %2335 = vmatprep.subr.bf16.mxu0 0
        %2336 = vmatpush1.bf16.msra.mxu0 0
        %2337 = vmatprep.subr.bf16.mxu0 0
        %2338 = vmatpush1.bf16.msra.mxu0 0
        %2339 = vmatprep.subr.bf16.mxu0 0
        %2340 = vmatpush1.bf16.msra.mxu0 0
        %2341 = vmatprep.subr.bf16.mxu0 0
        %2342 = vmatpush1.bf16.msra.mxu0 0
        %2343 = vmatprep.subr.bf16.mxu0 0
        %2344 = vmatpush1.bf16.msra.mxu0 0
        %2345 = vmatprep.mubr.bf16.mxu0 0
        %2346 = vmatmul.mubr.bf16.gmra.mrb[0].mxu0 %v2241
        %v2347 = vpop.f32.mrb[0].mxu0
        %v2348 = vadd.f32 %v2263, %v2347
        %v2349 = vpop.f32.mrb[0].mxu0
        %v2350 = vpop.f32.mrb[0].mxu0
        %v2351 = vadd.f32 %v2263, %v2350
        %v2352 = vpop.f32.mrb[0].mxu0
        %2353 = vdwg.mxu0
        %v2354 = vmul.f32 %v2348, %v509
        %v2355 = vmul.f32 %v2351, %v514
        %2356 = vst [vmem:[%s410] sm:$0xff] %v2354
        %2357 = vst [vmem:[%s410 + $0x8] sm:$0xff] %v2355
        %s2358 = sand.u32 %s259, 1
        %s2359 = scalar_lea.sflag [#allocation5], %s2358
        %s2360 = sand.u32 %s259, 1
        %s2361 = smul.addr %s2360, 16
        %s2362 = scalar_lea.vmem [#allocation8], %s2361
        // Predicated region
        $region69: #{tpu_custom_call.1} parent=59 // pred_check
          %p2363 = pneg %p269
        $region70: #{tpu_custom_call.1} parent=59 // pred_check_branch
          %2365 = sbr.rel (%p2363) target = $region72
        $region71: #{tpu_custom_call.1} parent=59 // pred_region
          %s2367 = ssub.s32 256, 256
          %2368 = vsyncadd %s2359, %s2367
          %s2369 = smul.addr %s26, 2
          %s2370 = smul.addr %s2369, 128
          %s2371 = scalar_lea.hbm %s10, %s2370
          %s2372 = sshll.u32 %s2362, 4
          %s2373 = int_to_ptr.vmem [resolvable:$true] %s2372
          %2378 = dma.vmem_to_hbm [thread:$0]  %s2373, 256, %s2371, %s2359, 128, 128, 8
        $region72: #{tpu_custom_call.1} parent=59 // pred_fallthru
          _
      $region60: #{tpu_custom_call.1} parent=5 // pred_fallthru
        _
      %p2379 = scmp.le.s32.totalorder 2, %s21
      // Predicated region
      $region73: #{tpu_custom_call.1} parent=5 // pred_check
        %p2380 = pneg %p2379
      $region74: #{tpu_custom_call.1} parent=5 // pred_check_branch
        %2382 = sbr.rel (%p2380) target = $region76
      $region75: #{tpu_custom_call.1} parent=5 // pred_region
        %s2383 = ssub.s32 %s21, 2
        // Predicated region
        $region77: #{tpu_custom_call.1} parent=75 // pred_check
          %p2384 = pneg %p275
        $region78: #{tpu_custom_call.1} parent=75 // pred_check_branch
          %2386 = sbr.rel (%p2384) target = $region80
        $region79: #{tpu_custom_call.1} parent=75 // pred_region
          %s2387 = sand.u32 %s260, 1
          %s2388 = scalar_lea.sflag [#allocation5], %s2387
          %s2389 = sand.u32 %s260, 1
          %s2390 = smul.addr %s2389, 16
          %s2391 = scalar_lea.vmem [#allocation8], %s2390
          %2392 = dma.done %s2388, 256
        $region80: #{tpu_custom_call.1} parent=75 // pred_fallthru
          _
      $region76: #{tpu_custom_call.1} parent=5 // pred_fallthru
        _
    $region6: #{tpu_custom_call.1} parent=1 // loop_footer
      %s25 = sadd.s32 1, %s21
    $region7: #{tpu_custom_call.1} parent=1 // loop_footer_branch
      %20 = sbr.rel target = $region3
    $region8: #{tpu_custom_call.1} parent=1 // loop_exit
      _
    %2393 = vsyncpa [#allocation4], 1
    %s2394 = scalar_lea.sflag [#allocation4], 1
    %2395 = vsyncpa %s2394, 1
    %2396 = vsyncpa [#allocation7], 1
    %2397 = vsyncpa [#allocation5], 1
    %s2398 = scalar_lea.sflag [#allocation5], 1
    %2399 = vsyncpa %s2398, 1

</llo_original>
